<compile_context>
chip_gen: v7x
topology: tpu7x:2x2x1
jax: 0.10.0
libtpu: 0.0.40
codegen_flags: <defaults>
</compile_context>

<pallas_src>
import jax
import jax.numpy as jnp
from jax import lax
from jax.experimental import pallas as pl
from jax.experimental.pallas import tpu as pltpu


# ---------------------------------------------------------------------------
# Kernel: one batch element per grid step.
# ---------------------------------------------------------------------------
def _slot_flow_kernel(slots_ref, pos_t_ref, w1_ref, b1_ref, w2_ref, b2_ref,
                      pf_ref, of_ref, masks_ref):
    # slots_ref : (1, K, D)     one batch element's slots (torch-native layout)
    # pos_t_ref : (D, HW)       positional embedding (Linear(grid)), channels on sublanes
    # w1_ref    : (HID, D)      h = relu(W1 @ x + b1)
    # b1_ref    : (HID, 1)
    # w2_ref    : (3, HID)      y = W2 @ h + b2 ; rows = (flow_x, flow_y, alpha_logit)
    # b2_ref    : (3, 1)
    # pf_ref    : (1, 2, HW)    predicted (composited) flow
    # of_ref    : (1, K, 2*HW)  per-object flows, lane-dense (k, c*HW + p) layout
    # masks_ref : (1, K, HW)    per-object alpha masks (post-softmax over K)
    n_slots = slots_ref.shape[1]

    slots = slots_ref[0]                         # (K, D)
    w1 = w1_ref[...]                             # (HID, D)
    w2 = w2_ref[...]                             # (3, HID)
    b2 = b2_ref[...]                             # (3, 1)

    # Layer 1, with the spatial broadcast folded in algebraically:
    #   W1 @ (slot_k + pos_p) + b1 = (W1 @ slots^T)[:, k] + (W1 @ pos + b1)[:, p]
    s_h = lax.dot_general(w1, slots, (((1,), (1,)), ((), ())),
                          preferred_element_type=jnp.float32)                    # (HID, K)
    p_h = jnp.dot(w1, pos_t_ref[...],
                  preferred_element_type=jnp.float32) + b1_ref[...]              # (HID, HW)

    # Layer 2 per slot (K statically unrolled); everything stays in registers.
    fx_rows, fy_rows, lg_rows = [], [], []
    for k in range(n_slots):
        h_k = jnp.maximum(s_h[:, k:k + 1] + p_h, 0.0)                            # (HID, HW)
        y_k = jnp.dot(w2, h_k, preferred_element_type=jnp.float32) + b2          # (3, HW)
        fx_rows.append(y_k[0:1, :])
        fy_rows.append(y_k[1:2, :])
        lg_rows.append(y_k[2:3, :])
    fx = jnp.concatenate(fx_rows, axis=0)                                        # (K, HW)
    fy = jnp.concatenate(fy_rows, axis=0)                                        # (K, HW)
    logits = jnp.concatenate(lg_rows, axis=0)                                    # (K, HW)

    # Softmax over the slot axis (cross-sublane max / sum on a (K, HW) tile).
    m = jnp.max(logits, axis=0, keepdims=True)                                   # (1, HW)
    e = jnp.exp(logits - m)                                                      # (K, HW)
    alpha = e / jnp.sum(e, axis=0, keepdims=True)                                # (K, HW)

    masks_ref[0] = alpha.astype(masks_ref.dtype)
    # Per-object flows as one lane-dense (K, 2*HW) = (8, 128) tile (unmasked store).
    of_ref[0] = jnp.concatenate([fx, fy], axis=1).astype(of_ref.dtype)           # (K, 2*HW)
    # Alpha-weighted compositing of the per-object flows (sublane reduction over K).
    pf_x = jnp.sum(fx * alpha, axis=0, keepdims=True)                            # (1, HW)
    pf_y = jnp.sum(fy * alpha, axis=0, keepdims=True)                            # (1, HW)
    pf_ref[0] = jnp.concatenate([pf_x, pf_y], axis=0).astype(pf_ref.dtype)       # (2, HW)


def slot_flow_decode(slots, pos_t, w1, b1, w2, b2):
    """slots: (B, K, D); pos_t: (D, HW).
    Returns (pf (B,2,HW), of (B,K,2*HW), masks (B,K,HW))."""
    B, K, D = slots.shape
    HID = w1.shape[0]
    HW = pos_t.shape[1]
    C = w2.shape[0]  # 3 = 2 flow + 1 alpha

    flops = B * (2 * HID * D * (K + HW) + K * 2 * C * HID * HW + K * HW * (2 * HID + 8))
    bytes_accessed = 4 * (B * K * D + D * HW + HID * D + HID + C * HID + C
                          + B * 2 * HW + B * K * 2 * HW + B * K * HW)
    cost = pl.CostEstimate(flops=flops, transcendentals=B * K * HW,
                           bytes_accessed=bytes_accessed)

    return pl.pallas_call(
        _slot_flow_kernel,
        out_shape=(
            jax.ShapeDtypeStruct((B, 2, HW), slots.dtype),       # predicted_flow
            jax.ShapeDtypeStruct((B, K, 2 * HW), slots.dtype),   # object_flows (lane-dense)
            jax.ShapeDtypeStruct((B, K, HW), slots.dtype),       # masks
        ),
        grid_spec=pltpu.PrefetchScalarGridSpec(
            num_scalar_prefetch=0,
            grid=(B,),
            in_specs=[
                pl.BlockSpec((1, K, D), lambda b: (b, 0, 0)),
                pl.BlockSpec((D, HW), lambda b: (0, 0)),
                pl.BlockSpec((HID, D), lambda b: (0, 0)),
                pl.BlockSpec((HID, 1), lambda b: (0, 0)),
                pl.BlockSpec((C, HID), lambda b: (0, 0)),
                pl.BlockSpec((C, 1), lambda b: (0, 0)),
            ],
            out_specs=[
                pl.BlockSpec((1, 2, HW), lambda b: (b, 0, 0)),
                pl.BlockSpec((1, K, 2 * HW), lambda b: (b, 0, 0)),
                pl.BlockSpec((1, K, HW), lambda b: (b, 0, 0)),
            ],
        ),
        compiler_params=pltpu.CompilerParams(dimension_semantics=("parallel",)),
        cost_estimate=cost,
    )(slots, pos_t, w1, b1, w2, b2)


# ---------------------------------------------------------------------------
# Module wrapper
# ---------------------------------------------------------------------------
class SlotAttentionOpticalFlowDecoderPallas:
    """SlotAttentionOpticalFlowDecoder with a soft positional embedding and a
    per-pixel MLP decoder (D -> hidden -> 3), implemented as one fused Pallas kernel."""

    def __init__(self, slot_dim, hidden_dim=64, *, key):
        self.initial_conv_size = (8, 8)
        H, W = self.initial_conv_size
        # build_grid_of_positions((8, 8)) equivalent: (HW, 2) grid of positions in [0, 1].
        ys = jnp.linspace(0.0, 1.0, H)
        xs = jnp.linspace(0.0, 1.0, W)
        gy, gx = jnp.meshgrid(ys, xs, indexing="ij")
        self.grid = jnp.stack([gy, gx], axis=-1).reshape(H * W, 2)

        k1, k2, k3 = jax.random.split(key, 3)
        d, hid = slot_dim, hidden_dim
        # Deterministic synthetic parameters (no checkpoint load).
        self.wp = jax.random.normal(k1, (2, d), jnp.float32) * (1.0 / jnp.sqrt(2.0))
        self.bp = jnp.zeros((d,), jnp.float32)
        self.w1 = jax.random.normal(k2, (hid, d), jnp.float32) * (1.0 / jnp.sqrt(d))
        self.b1 = jnp.zeros((hid, 1), jnp.float32)
        self.w2 = jax.random.normal(k3, (3, hid), jnp.float32) * (1.0 / jnp.sqrt(hid))
        self.b2 = jnp.zeros((3, 1), jnp.float32)

    def __call__(self, object_features):
        # object_features: (B, K, D) slot features (consumed by the kernel as-is).
        assert object_features.ndim == 3
        B, K, D = object_features.shape
        H, W = self.initial_conv_size

        # Soft positional embedding of the coordinate grid (tiny, parameter-only work).
        pos_t = (self.grid @ self.wp + self.bp).T          # (D, HW)

        pf, of, masks = slot_flow_decode(object_features, pos_t,
                                         self.w1, self.b1, self.w2, self.b2)

        # Pure (free) reshapes back to the torch layouts — no transposes.
        return {
            "predicted_flow": pf.reshape(B, 2, H, W),
            "object_flows": of.reshape(B, K, 2, H, W),
            "masks": masks.reshape(B, K, H, W),
        }


# ---------------------------------------------------------------------------
# Pure-JAX reference (mirrors the torch forward op-for-op) for a sanity check.
# ---------------------------------------------------------------------------
def _reference(dec, object_features):
    B, K, D = object_features.shape
    H, W = dec.initial_conv_size
    HW = H * W
    hi = jax.lax.Precision.HIGHEST
    x = object_features.reshape(B * K, D)
    x = jnp.broadcast_to(x[:, :, None], (B * K, D, HW))                    # spatial broadcast
    pos_t = (dec.grid @ dec.wp + dec.bp).T                                 # (D, HW)
    x = x + pos_t[None]                                                    # positional embedding
    h = jnp.maximum(jnp.einsum("od,ndp->nop", dec.w1, x, precision=hi) + dec.b1[None], 0.0)
    y = jnp.einsum("oh,nhp->nop", dec.w2, h, precision=hi) + dec.b2[None]  # (B*K, 3, HW)
    y = y.reshape(B, K, 3, H, W)
    flow = y[:, :, :2]
    alpha = jax.nn.softmax(y[:, :, 2:3], axis=1)                           # softmax over slots
    predicted_flow = (flow * alpha).sum(axis=1)
    masks = alpha[:, :, 0]
    return predicted_flow, flow, masks


if __name__ == "__main__":
    key = jax.random.PRNGKey(0)
    k_param, k_x = jax.random.split(key)

    # Small shapes: batch=2, n_objects(slots)=8, slot_dim=32, hidden=64, 8x8 broadcast grid.
    B, K, D, HID = 2, 8, 32, 64
    dec = SlotAttentionOpticalFlowDecoderPallas(D, HID, key=k_param)
    H, W = dec.initial_conv_size

    object_features = jax.random.normal(k_x, (B, K, D), jnp.float32)

    out = dec(object_features)
    pf = jax.block_until_ready(out["predicted_flow"])
    of = out["object_flows"]
    masks = out["masks"]
    assert pf.shape == (B, 2, H, W), pf.shape
    assert of.shape == (B, K, 2, H, W), of.shape
    assert masks.shape == (B, K, H, W), masks.shape

    pf_r, of_r, masks_r = _reference(dec, object_features)
    assert jnp.allclose(pf, pf_r, atol=1e-3, rtol=1e-3), "predicted_flow mismatch vs reference"
    assert jnp.allclose(of, of_r, atol=1e-3, rtol=1e-3), "object_flows mismatch vs reference"
    assert jnp.allclose(masks, masks_r, atol=1e-3, rtol=1e-3), "masks mismatch vs reference"
    assert jnp.allclose(masks.sum(axis=1), jnp.ones((B, H, W)), atol=1e-4), "masks not normalized"

    print("KERNEL_OK")
</pallas_src>

<mosaic_0001>
module attributes {stable_mosaic.version = 11 : i64} {
  func.func @_slot_flow_kernel(%arg0: i32, %arg1: memref<1x8x32xf32, #tpu.memory_space<vmem>>, %arg2: memref<32x64xf32, #tpu.memory_space<vmem>>, %arg3: memref<64x32xf32, #tpu.memory_space<vmem>>, %arg4: memref<64x1xf32, #tpu.memory_space<vmem>>, %arg5: memref<3x64xf32, #tpu.memory_space<vmem>>, %arg6: memref<3x1xf32, #tpu.memory_space<vmem>>, %arg7: memref<1x2x64xf32, #tpu.memory_space<vmem>>, %arg8: memref<1x8x128xf32, #tpu.memory_space<vmem>>, %arg9: memref<1x8x64xf32, #tpu.memory_space<vmem>>) attributes {dimension_semantics = [#tpu.dimension_semantics<parallel>], iteration_bounds = array<i64: 2>, scalar_prefetch = 0 : i64, scratch_operands = 0 : i64, tpu.core_type = #tpu.core_type<tc>, window_params = [{transform_indices = @transform_0, window_bounds = array<i64: 1, 8, 32>}, {pipeline_mode = #tpu.pipeline_mode<synchronous>, transform_indices = @transform_1, window_bounds = array<i64: 32, 64>}, {pipeline_mode = #tpu.pipeline_mode<synchronous>, transform_indices = @transform_2, window_bounds = array<i64: 64, 32>}, {pipeline_mode = #tpu.pipeline_mode<synchronous>, transform_indices = @transform_3, window_bounds = array<i64: 64, 1>}, {pipeline_mode = #tpu.pipeline_mode<synchronous>, transform_indices = @transform_4, window_bounds = array<i64: 3, 64>}, {pipeline_mode = #tpu.pipeline_mode<synchronous>, transform_indices = @transform_5, window_bounds = array<i64: 3, 1>}, {transform_indices = @transform_6, window_bounds = array<i64: 1, 2, 64>}, {transform_indices = @transform_7, window_bounds = array<i64: 1, 8, 128>}, {transform_indices = @transform_8, window_bounds = array<i64: 1, 8, 64>}]} {
    %c0 = arith.constant 0 : index
    %c0_0 = arith.constant 0 : index
    %c0_1 = arith.constant 0 : index
    %0 = vector.load %arg1[%c0, %c0_0, %c0_1] : memref<1x8x32xf32, #tpu.memory_space<vmem>>, vector<1x8x32xf32>
    %1 = vector.shape_cast %0 : vector<1x8x32xf32> to vector<8x32xf32>
    %c0_2 = arith.constant 0 : index
    %c0_3 = arith.constant 0 : index
    %2 = vector.load %arg3[%c0_2, %c0_3] : memref<64x32xf32, #tpu.memory_space<vmem>>, vector<64x32xf32>
    %c0_4 = arith.constant 0 : index
    %c0_5 = arith.constant 0 : index
    %3 = vector.load %arg5[%c0_4, %c0_5] : memref<3x64xf32, #tpu.memory_space<vmem>>, vector<3x64xf32>
    %c0_6 = arith.constant 0 : index
    %c0_7 = arith.constant 0 : index
    %4 = vector.load %arg6[%c0_6, %c0_7] : memref<3x1xf32, #tpu.memory_space<vmem>>, vector<3x1xf32>
    %cst = arith.constant dense<0.000000e+00> : vector<64x8xf32>
    %5 = tpu.matmul %2, %1, %cst {dimension_numbers = #tpu.dot_dimension_numbers<[1], [1], [0], [0], [0, 0, 1, 0], [], []>} : vector<64x32xf32>, vector<8x32xf32>, vector<64x8xf32> -> vector<64x8xf32>
    %c0_8 = arith.constant 0 : index
    %c0_9 = arith.constant 0 : index
    %6 = vector.load %arg2[%c0_8, %c0_9] : memref<32x64xf32, #tpu.memory_space<vmem>>, vector<32x64xf32>
    %cst_10 = arith.constant dense<0.000000e+00> : vector<64x64xf32>
    %7 = tpu.matmul %2, %6, %cst_10 {dimension_numbers = #tpu.dot_dimension_numbers<[1], [0], [0], [1], [0, 0, 1, 1], [], []>} : vector<64x32xf32>, vector<32x64xf32>, vector<64x64xf32> -> vector<64x64xf32>
    %c0_11 = arith.constant 0 : index
    %c0_12 = arith.constant 0 : index
    %8 = vector.load %arg4[%c0_11, %c0_12] : memref<64x1xf32, #tpu.memory_space<vmem>>, vector<64x1xf32>
    %9 = vector.broadcast %8 : vector<64x1xf32> to vector<64x64xf32>
    %10 = arith.addf %7, %9 : vector<64x64xf32>
    %11 = vector.extract_strided_slice %5 {offsets = [0, 0], sizes = [64, 1], strides = [1, 1]} : vector<64x8xf32> to vector<64x1xf32>
    %12 = vector.broadcast %11 : vector<64x1xf32> to vector<64x64xf32>
    %13 = arith.addf %12, %10 : vector<64x64xf32>
    %cst_13 = arith.constant 0.000000e+00 : f32
    %14 = vector.broadcast %cst_13 : f32 to vector<64x64xf32>
    %15 = arith.maximumf %13, %14 : vector<64x64xf32>
    %cst_14 = arith.constant dense<0.000000e+00> : vector<3x64xf32>
    %16 = tpu.matmul %3, %15, %cst_14 {dimension_numbers = #tpu.dot_dimension_numbers<[1], [0], [0], [1], [0, 0, 1, 1], [], []>} : vector<3x64xf32>, vector<64x64xf32>, vector<3x64xf32> -> vector<3x64xf32>
    %17 = vector.broadcast %4 : vector<3x1xf32> to vector<3x64xf32>
    %18 = arith.addf %16, %17 : vector<3x64xf32>
    %19 = vector.extract_strided_slice %18 {offsets = [0, 0], sizes = [1, 64], strides = [1, 1]} : vector<3x64xf32> to vector<1x64xf32>
    %20 = vector.extract_strided_slice %18 {offsets = [1, 0], sizes = [1, 64], strides = [1, 1]} : vector<3x64xf32> to vector<1x64xf32>
    %21 = vector.extract_strided_slice %18 {offsets = [2, 0], sizes = [1, 64], strides = [1, 1]} : vector<3x64xf32> to vector<1x64xf32>
    %22 = vector.extract_strided_slice %5 {offsets = [0, 1], sizes = [64, 1], strides = [1, 1]} : vector<64x8xf32> to vector<64x1xf32>
    %23 = vector.broadcast %22 : vector<64x1xf32> to vector<64x64xf32>
    %24 = arith.addf %23, %10 : vector<64x64xf32>
    %cst_15 = arith.constant 0.000000e+00 : f32
    %25 = vector.broadcast %cst_15 : f32 to vector<64x64xf32>
    %26 = arith.maximumf %24, %25 : vector<64x64xf32>
    %cst_16 = arith.constant dense<0.000000e+00> : vector<3x64xf32>
    %27 = tpu.matmul %3, %26, %cst_16 {dimension_numbers = #tpu.dot_dimension_numbers<[1], [0], [0], [1], [0, 0, 1, 1], [], []>} : vector<3x64xf32>, vector<64x64xf32>, vector<3x64xf32> -> vector<3x64xf32>
    %28 = vector.broadcast %4 : vector<3x1xf32> to vector<3x64xf32>
    %29 = arith.addf %27, %28 : vector<3x64xf32>
    %30 = vector.extract_strided_slice %29 {offsets = [0, 0], sizes = [1, 64], strides = [1, 1]} : vector<3x64xf32> to vector<1x64xf32>
    %31 = vector.extract_strided_slice %29 {offsets = [1, 0], sizes = [1, 64], strides = [1, 1]} : vector<3x64xf32> to vector<1x64xf32>
    %32 = vector.extract_strided_slice %29 {offsets = [2, 0], sizes = [1, 64], strides = [1, 1]} : vector<3x64xf32> to vector<1x64xf32>
    %33 = vector.extract_strided_slice %5 {offsets = [0, 2], sizes = [64, 1], strides = [1, 1]} : vector<64x8xf32> to vector<64x1xf32>
    %34 = vector.broadcast %33 : vector<64x1xf32> to vector<64x64xf32>
    %35 = arith.addf %34, %10 : vector<64x64xf32>
    %cst_17 = arith.constant 0.000000e+00 : f32
    %36 = vector.broadcast %cst_17 : f32 to vector<64x64xf32>
    %37 = arith.maximumf %35, %36 : vector<64x64xf32>
    %cst_18 = arith.constant dense<0.000000e+00> : vector<3x64xf32>
    %38 = tpu.matmul %3, %37, %cst_18 {dimension_numbers = #tpu.dot_dimension_numbers<[1], [0], [0], [1], [0, 0, 1, 1], [], []>} : vector<3x64xf32>, vector<64x64xf32>, vector<3x64xf32> -> vector<3x64xf32>
    %39 = vector.broadcast %4 : vector<3x1xf32> to vector<3x64xf32>
    %40 = arith.addf %38, %39 : vector<3x64xf32>
    %41 = vector.extract_strided_slice %40 {offsets = [0, 0], sizes = [1, 64], strides = [1, 1]} : vector<3x64xf32> to vector<1x64xf32>
    %42 = vector.extract_strided_slice %40 {offsets = [1, 0], sizes = [1, 64], strides = [1, 1]} : vector<3x64xf32> to vector<1x64xf32>
    %43 = vector.extract_strided_slice %40 {offsets = [2, 0], sizes = [1, 64], strides = [1, 1]} : vector<3x64xf32> to vector<1x64xf32>
    %44 = vector.extract_strided_slice %5 {offsets = [0, 3], sizes = [64, 1], strides = [1, 1]} : vector<64x8xf32> to vector<64x1xf32>
    %45 = vector.broadcast %44 : vector<64x1xf32> to vector<64x64xf32>
    %46 = arith.addf %45, %10 : vector<64x64xf32>
    %cst_19 = arith.constant 0.000000e+00 : f32
    %47 = vector.broadcast %cst_19 : f32 to vector<64x64xf32>
    %48 = arith.maximumf %46, %47 : vector<64x64xf32>
    %cst_20 = arith.constant dense<0.000000e+00> : vector<3x64xf32>
    %49 = tpu.matmul %3, %48, %cst_20 {dimension_numbers = #tpu.dot_dimension_numbers<[1], [0], [0], [1], [0, 0, 1, 1], [], []>} : vector<3x64xf32>, vector<64x64xf32>, vector<3x64xf32> -> vector<3x64xf32>
    %50 = vector.broadcast %4 : vector<3x1xf32> to vector<3x64xf32>
    %51 = arith.addf %49, %50 : vector<3x64xf32>
    %52 = vector.extract_strided_slice %51 {offsets = [0, 0], sizes = [1, 64], strides = [1, 1]} : vector<3x64xf32> to vector<1x64xf32>
    %53 = vector.extract_strided_slice %51 {offsets = [1, 0], sizes = [1, 64], strides = [1, 1]} : vector<3x64xf32> to vector<1x64xf32>
    %54 = vector.extract_strided_slice %51 {offsets = [2, 0], sizes = [1, 64], strides = [1, 1]} : vector<3x64xf32> to vector<1x64xf32>
    %55 = vector.extract_strided_slice %5 {offsets = [0, 4], sizes = [64, 1], strides = [1, 1]} : vector<64x8xf32> to vector<64x1xf32>
    %56 = vector.broadcast %55 : vector<64x1xf32> to vector<64x64xf32>
    %57 = arith.addf %56, %10 : vector<64x64xf32>
    %cst_21 = arith.constant 0.000000e+00 : f32
    %58 = vector.broadcast %cst_21 : f32 to vector<64x64xf32>
    %59 = arith.maximumf %57, %58 : vector<64x64xf32>
    %cst_22 = arith.constant dense<0.000000e+00> : vector<3x64xf32>
    %60 = tpu.matmul %3, %59, %cst_22 {dimension_numbers = #tpu.dot_dimension_numbers<[1], [0], [0], [1], [0, 0, 1, 1], [], []>} : vector<3x64xf32>, vector<64x64xf32>, vector<3x64xf32> -> vector<3x64xf32>
    %61 = vector.broadcast %4 : vector<3x1xf32> to vector<3x64xf32>
    %62 = arith.addf %60, %61 : vector<3x64xf32>
    %63 = vector.extract_strided_slice %62 {offsets = [0, 0], sizes = [1, 64], strides = [1, 1]} : vector<3x64xf32> to vector<1x64xf32>
    %64 = vector.extract_strided_slice %62 {offsets = [1, 0], sizes = [1, 64], strides = [1, 1]} : vector<3x64xf32> to vector<1x64xf32>
    %65 = vector.extract_strided_slice %62 {offsets = [2, 0], sizes = [1, 64], strides = [1, 1]} : vector<3x64xf32> to vector<1x64xf32>
    %66 = vector.extract_strided_slice %5 {offsets = [0, 5], sizes = [64, 1], strides = [1, 1]} : vector<64x8xf32> to vector<64x1xf32>
    %67 = vector.broadcast %66 : vector<64x1xf32> to vector<64x64xf32>
    %68 = arith.addf %67, %10 : vector<64x64xf32>
    %cst_23 = arith.constant 0.000000e+00 : f32
    %69 = vector.broadcast %cst_23 : f32 to vector<64x64xf32>
    %70 = arith.maximumf %68, %69 : vector<64x64xf32>
    %cst_24 = arith.constant dense<0.000000e+00> : vector<3x64xf32>
    %71 = tpu.matmul %3, %70, %cst_24 {dimension_numbers = #tpu.dot_dimension_numbers<[1], [0], [0], [1], [0, 0, 1, 1], [], []>} : vector<3x64xf32>, vector<64x64xf32>, vector<3x64xf32> -> vector<3x64xf32>
    %72 = vector.broadcast %4 : vector<3x1xf32> to vector<3x64xf32>
    %73 = arith.addf %71, %72 : vector<3x64xf32>
    %74 = vector.extract_strided_slice %73 {offsets = [0, 0], sizes = [1, 64], strides = [1, 1]} : vector<3x64xf32> to vector<1x64xf32>
    %75 = vector.extract_strided_slice %73 {offsets = [1, 0], sizes = [1, 64], strides = [1, 1]} : vector<3x64xf32> to vector<1x64xf32>
    %76 = vector.extract_strided_slice %73 {offsets = [2, 0], sizes = [1, 64], strides = [1, 1]} : vector<3x64xf32> to vector<1x64xf32>
    %77 = vector.extract_strided_slice %5 {offsets = [0, 6], sizes = [64, 1], strides = [1, 1]} : vector<64x8xf32> to vector<64x1xf32>
    %78 = vector.broadcast %77 : vector<64x1xf32> to vector<64x64xf32>
    %79 = arith.addf %78, %10 : vector<64x64xf32>
    %cst_25 = arith.constant 0.000000e+00 : f32
    %80 = vector.broadcast %cst_25 : f32 to vector<64x64xf32>
    %81 = arith.maximumf %79, %80 : vector<64x64xf32>
    %cst_26 = arith.constant dense<0.000000e+00> : vector<3x64xf32>
    %82 = tpu.matmul %3, %81, %cst_26 {dimension_numbers = #tpu.dot_dimension_numbers<[1], [0], [0], [1], [0, 0, 1, 1], [], []>} : vector<3x64xf32>, vector<64x64xf32>, vector<3x64xf32> -> vector<3x64xf32>
    %83 = vector.broadcast %4 : vector<3x1xf32> to vector<3x64xf32>
    %84 = arith.addf %82, %83 : vector<3x64xf32>
    %85 = vector.extract_strided_slice %84 {offsets = [0, 0], sizes = [1, 64], strides = [1, 1]} : vector<3x64xf32> to vector<1x64xf32>
    %86 = vector.extract_strided_slice %84 {offsets = [1, 0], sizes = [1, 64], strides = [1, 1]} : vector<3x64xf32> to vector<1x64xf32>
    %87 = vector.extract_strided_slice %84 {offsets = [2, 0], sizes = [1, 64], strides = [1, 1]} : vector<3x64xf32> to vector<1x64xf32>
    %88 = vector.extract_strided_slice %5 {offsets = [0, 7], sizes = [64, 1], strides = [1, 1]} : vector<64x8xf32> to vector<64x1xf32>
    %89 = vector.broadcast %88 : vector<64x1xf32> to vector<64x64xf32>
    %90 = arith.addf %89, %10 : vector<64x64xf32>
    %cst_27 = arith.constant 0.000000e+00 : f32
    %91 = vector.broadcast %cst_27 : f32 to vector<64x64xf32>
    %92 = arith.maximumf %90, %91 : vector<64x64xf32>
    %cst_28 = arith.constant dense<0.000000e+00> : vector<3x64xf32>
    %93 = tpu.matmul %3, %92, %cst_28 {dimension_numbers = #tpu.dot_dimension_numbers<[1], [0], [0], [1], [0, 0, 1, 1], [], []>} : vector<3x64xf32>, vector<64x64xf32>, vector<3x64xf32> -> vector<3x64xf32>
    %94 = vector.broadcast %4 : vector<3x1xf32> to vector<3x64xf32>
    %95 = arith.addf %93, %94 : vector<3x64xf32>
    %96 = vector.extract_strided_slice %95 {offsets = [0, 0], sizes = [1, 64], strides = [1, 1]} : vector<3x64xf32> to vector<1x64xf32>
    %97 = vector.extract_strided_slice %95 {offsets = [1, 0], sizes = [1, 64], strides = [1, 1]} : vector<3x64xf32> to vector<1x64xf32>
    %98 = vector.extract_strided_slice %95 {offsets = [2, 0], sizes = [1, 64], strides = [1, 1]} : vector<3x64xf32> to vector<1x64xf32>
    %99 = tpu.concatenate %19, %30, %41, %52, %63, %74, %85, %96 in 0 : vector<1x64xf32>, vector<1x64xf32>, vector<1x64xf32>, vector<1x64xf32>, vector<1x64xf32>, vector<1x64xf32>, vector<1x64xf32>, vector<1x64xf32> -> vector<8x64xf32>
    %100 = tpu.concatenate %20, %31, %42, %53, %64, %75, %86, %97 in 0 : vector<1x64xf32>, vector<1x64xf32>, vector<1x64xf32>, vector<1x64xf32>, vector<1x64xf32>, vector<1x64xf32>, vector<1x64xf32>, vector<1x64xf32> -> vector<8x64xf32>
    %101 = tpu.concatenate %21, %32, %43, %54, %65, %76, %87, %98 in 0 : vector<1x64xf32>, vector<1x64xf32>, vector<1x64xf32>, vector<1x64xf32>, vector<1x64xf32>, vector<1x64xf32>, vector<1x64xf32>, vector<1x64xf32> -> vector<8x64xf32>
    %cst_29 = arith.constant dense<0xFF800000> : vector<64xf32>
    %102 = vector.multi_reduction <maximumf>, %101, %cst_29 [0] : vector<8x64xf32> to vector<64xf32>
    %103 = vector.shape_cast %102 : vector<64xf32> to vector<1x64xf32>
    %104 = vector.broadcast %103 : vector<1x64xf32> to vector<8x64xf32>
    %105 = arith.subf %101, %104 : vector<8x64xf32>
    %106 = math.exp %105 : vector<8x64xf32>
    %cst_30 = arith.constant dense<0.000000e+00> : vector<64xf32>
    %107 = vector.multi_reduction <add>, %106, %cst_30 [0] : vector<8x64xf32> to vector<64xf32>
    %108 = vector.shape_cast %107 : vector<64xf32> to vector<1x64xf32>
    %109 = vector.broadcast %108 : vector<1x64xf32> to vector<8x64xf32>
    %110 = arith.divf %106, %109 : vector<8x64xf32>
    %c0_31 = arith.constant 0 : index
    %c0_32 = arith.constant 0 : index
    %c0_33 = arith.constant 0 : index
    %111 = vector.load %arg9[%c0_31, %c0_32, %c0_33] : memref<1x8x64xf32, #tpu.memory_space<vmem>>, vector<1x8x64xf32>
    %112 = vector.shape_cast %111 : vector<1x8x64xf32> to vector<8x64xf32>
    %113 = vector.shape_cast %110 : vector<8x64xf32> to vector<1x8x64xf32>
    tpu.vector_store %arg9[%c0_31, %c0_32, %c0_33], %113 {strides = array<i32>} : memref<1x8x64xf32, #tpu.memory_space<vmem>>, vector<1x8x64xf32>,
    %114 = tpu.concatenate %99, %100 in 1 : vector<8x64xf32>, vector<8x64xf32> -> vector<8x128xf32>
    %c0_34 = arith.constant 0 : index
    %c0_35 = arith.constant 0 : index
    %c0_36 = arith.constant 0 : index
    %115 = vector.load %arg8[%c0_34, %c0_35, %c0_36] : memref<1x8x128xf32, #tpu.memory_space<vmem>>, vector<1x8x128xf32>
    %116 = vector.shape_cast %115 : vector<1x8x128xf32> to vector<8x128xf32>
    %117 = vector.shape_cast %114 : vector<8x128xf32> to vector<1x8x128xf32>
    tpu.vector_store %arg8[%c0_34, %c0_35, %c0_36], %117 {strides = array<i32>} : memref<1x8x128xf32, #tpu.memory_space<vmem>>, vector<1x8x128xf32>,
    %118 = arith.mulf %99, %110 : vector<8x64xf32>
    %cst_37 = arith.constant dense<0.000000e+00> : vector<64xf32>
    %119 = vector.multi_reduction <add>, %118, %cst_37 [0] : vector<8x64xf32> to vector<64xf32>
    %120 = vector.shape_cast %119 : vector<64xf32> to vector<1x64xf32>
    %121 = arith.mulf %100, %110 : vector<8x64xf32>
    %cst_38 = arith.constant dense<0.000000e+00> : vector<64xf32>
    %122 = vector.multi_reduction <add>, %121, %cst_38 [0] : vector<8x64xf32> to vector<64xf32>
    %123 = vector.shape_cast %122 : vector<64xf32> to vector<1x64xf32>
    %124 = tpu.concatenate %120, %123 in 0 : vector<1x64xf32>, vector<1x64xf32> -> vector<2x64xf32>
    %c0_39 = arith.constant 0 : index
    %c0_40 = arith.constant 0 : index
    %c0_41 = arith.constant 0 : index
    %125 = vector.load %arg7[%c0_39, %c0_40, %c0_41] : memref<1x2x64xf32, #tpu.memory_space<vmem>>, vector<1x2x64xf32>
    %126 = vector.shape_cast %125 : vector<1x2x64xf32> to vector<2x64xf32>
    %127 = vector.shape_cast %124 : vector<2x64xf32> to vector<1x2x64xf32>
    tpu.vector_store %arg7[%c0_39, %c0_40, %c0_41], %127 {strides = array<i32>} : memref<1x2x64xf32, #tpu.memory_space<vmem>>, vector<1x2x64xf32>,
    return
  }
  func.func @transform_0(%arg0: i32) -> (i32, i32, i32) {
    %c0_i32 = arith.constant 0 : i32
    %c0_i32_0 = arith.constant 0 : i32
    %c0_i32_1 = arith.constant 0 : i32
    return %arg0, %c0_i32, %c0_i32_0 : i32, i32, i32
  }
  func.func @transform_1(%arg0: i32) -> (i32, i32) {
    %c0_i32 = arith.constant 0 : i32
    %c0_i32_0 = arith.constant 0 : i32
    %c0_i32_1 = arith.constant 0 : i32
    return %c0_i32, %c0_i32_0 : i32, i32
  }
  func.func @transform_2(%arg0: i32) -> (i32, i32) {
    %c0_i32 = arith.constant 0 : i32
    %c0_i32_0 = arith.constant 0 : i32
    %c0_i32_1 = arith.constant 0 : i32
    return %c0_i32, %c0_i32_0 : i32, i32
  }
  func.func @transform_3(%arg0: i32) -> (i32, i32) {
    %c0_i32 = arith.constant 0 : i32
    %c0_i32_0 = arith.constant 0 : i32
    %c0_i32_1 = arith.constant 0 : i32
    return %c0_i32, %c0_i32_0 : i32, i32
  }
  func.func @transform_4(%arg0: i32) -> (i32, i32) {
    %c0_i32 = arith.constant 0 : i32
    %c0_i32_0 = arith.constant 0 : i32
    %c0_i32_1 = arith.constant 0 : i32
    return %c0_i32, %c0_i32_0 : i32, i32
  }
  func.func @transform_5(%arg0: i32) -> (i32, i32) {
    %c0_i32 = arith.constant 0 : i32
    %c0_i32_0 = arith.constant 0 : i32
    %c0_i32_1 = arith.constant 0 : i32
    return %c0_i32, %c0_i32_0 : i32, i32
  }
  func.func @transform_6(%arg0: i32) -> (i32, i32, i32) {
    %c0_i32 = arith.constant 0 : i32
    %c0_i32_0 = arith.constant 0 : i32
    %c0_i32_1 = arith.constant 0 : i32
    return %arg0, %c0_i32, %c0_i32_0 : i32, i32, i32
  }
  func.func @transform_7(%arg0: i32) -> (i32, i32, i32) {
    %c0_i32 = arith.constant 0 : i32
    %c0_i32_0 = arith.constant 0 : i32
    %c0_i32_1 = arith.constant 0 : i32
    return %arg0, %c0_i32, %c0_i32_0 : i32, i32, i32
  }
  func.func @transform_8(%arg0: i32) -> (i32, i32, i32) {
    %c0_i32 = arith.constant 0 : i32
    %c0_i32_0 = arith.constant 0 : i32
    %c0_i32_1 = arith.constant 0 : i32
    return %arg0, %c0_i32, %c0_i32_0 : i32, i32, i32
  }
}

</mosaic_0001>

<llo_original>
// kernel: tpu_custom_call.1
$region0: #{tpu_custom_call.1}
  #allocation0 [shape = 'u32[]', space=smem, size = 0x4, offset = 0x4, fixed_abs, tag = 'smem constant byte address 0x4 - core index']
  #allocation1 [shape = 'u32[144,128]{1,0:T(1,128)}', space=vmem, size = 0x12000, scoped, tag = 'internal scratch']
  %s0 = inlined_call_operand.vmem [shape: f32[2,8,32], index: 0, kind: input, shape index: {}]
  %s1 = inlined_call_operand.vmem [shape: f32[32,64], index: 1, kind: input, shape index: {}]
  %s2 = inlined_call_operand.vmem [shape: f32[64,32], index: 2, kind: input, shape index: {}]
  %s3 = inlined_call_operand.vmem [shape: f32[64,1], index: 3, kind: input, shape index: {}]
  %s4 = inlined_call_operand.vmem [shape: f32[3,64], index: 4, kind: input, shape index: {}]
  %s5 = inlined_call_operand.vmem [shape: f32[3,1], index: 5, kind: input, shape index: {}]
  %s6 = inlined_call_operand.hbm [shape: f32[2,2,64], index: 6, kind: output, shape index: {0}]
  %s7 = inlined_call_operand.hbm [shape: f32[2,8,128], index: 7, kind: output, shape index: {1}]
  %s8 = inlined_call_operand.hbm [shape: f32[2,8,64], index: 8, kind: output, shape index: {2}]
  %9 = xla_tuple %s6, %s7, %s8
  %s10 = sld [smem:[#allocation0]]
  $region73: #{tpu_custom_call.1} parent=0
    _
  %s12 = ssub.s32 1, %s10
  %s13 = scalar_select 0, %s12, %s10
  $region1: #{tpu_custom_call.1} parent=0
    #allocation2 [shape = 'u8[2048]{0}', space=vmem, size = 0x800, scoped, tag = 'output window, operand 0']
    #allocation3 [shape = 's32[2]{0}', space=sflag, size = 0x8, scoped, tag = 'scoped memory for tpu_custom_call.1']
    #allocation4 [shape = 'u8[8192]{0}', space=vmem, size = 0x2000, scoped, tag = 'output window, operand 1']
    #allocation5 [shape = 's32[2]{0}', space=sflag, size = 0x8, scoped, tag = 'scoped memory for tpu_custom_call.1']
    #allocation6 [shape = 'u8[8192]{0}', space=vmem, size = 0x2000, scoped, tag = 'output window, operand 2']
    %14 = vsyncpa [#allocation3], 0
    %s15 = scalar_lea.sflag [#allocation3], 1
    %16 = vsyncpa %s15, 0
    %17 = vsyncpa [#allocation5], 0
    %s18 = scalar_lea.sflag [#allocation5], 1
    %19 = vsyncpa %s18, 0
    loop: start=0, step=1, limit=4
    $region2: #{tpu_custom_call.1} parent=1 // loop_pre_header
      _
    $region3: #{tpu_custom_call.1} parent=1 // loop_header
      %s21 = sphi 0, %s25
      %p22 = scmp.ge.s32.totalorder %s21, 4
      %s31 = sphi 0, %s33
      %s34 = sphi 0, %s31
      %s35 = sphi 0, %s34
      %s51 = sphi 0, %s35
      %s55 = sphi 0, %s55
      %s57 = sphi 0, %s55
      %s58 = sphi 0, %s57
      %s72 = sphi 0, %s58
      %s76 = sphi 0, %s76
      %s78 = sphi 0, %s76
      %s79 = sphi 0, %s78
      %s93 = sphi 0, %s79
      %s97 = sphi 0, %s97
      %s99 = sphi 0, %s97
      %s100 = sphi 0, %s99
      %s114 = sphi 0, %s100
      %s118 = sphi 0, %s118
      %s120 = sphi 0, %s118
      %s121 = sphi 0, %s120
      %s135 = sphi 0, %s121
      %s139 = sphi 0, %s139
      %s141 = sphi 0, %s139
      %s142 = sphi 0, %s141
      %s156 = sphi 0, %s142
      %s162 = sphi 0, %s164
      %s165 = sphi 0, %s162
      %s166 = sphi 0, %s165
      %s182 = sphi 0, %s166
      %s188 = sphi 0, %s190
      %s191 = sphi 0, %s188
      %s192 = sphi 0, %s191
      %s208 = sphi 0, %s192
      %s214 = sphi 0, %s216
      %s217 = sphi 0, %s214
      %s218 = sphi 0, %s217
      %s234 = sphi 0, %s218
    $region4: #{tpu_custom_call.1} parent=1 // loop_header_branch
      %24 = sbr.rel (%p22) target = $region8
    $region5: #{tpu_custom_call.1} parent=1 // loop_body
      %s26 = ssub.s32 %s21, 1
      %s27 = ssub.s32 %s21, 2
      %s28 = sadd.s32 %s21, 1
      %s29 = ssub.s32 %s21, %s28
      %p30 = scmp.eq.s32.totalorder %s29, 0
      %s32 = sadd.s32 %s31, 1
      %s33 = scalar_select %p30, %s31, %s32
      %p36 = pneg %p30
      %p37 = scmp.eq.s32.totalorder %s21, 1
      %p38 = por %p36, %p37
      %p39 = scmp.ne.s32.totalorder %s31, %s34
      %p40 = scmp.eq.s32.totalorder %s21, 0
      %p41 = por %p39, %p40
      %p42 = scmp.ne.s32.totalorder %s31, %s34
      %p43 = scmp.eq.s32.totalorder %s26, 1
      %p44 = por %p42, %p43
      %p45 = scmp.ne.s32.totalorder %s34, %s35
      %p46 = scmp.eq.s32.totalorder %s26, 0
      %p47 = por %p45, %p46
      %p48 = scmp.ne.s32.totalorder %s34, %s35
      %p49 = scmp.eq.s32.totalorder %s27, 1
      %p50 = por %p48, %p49
      %p52 = scmp.ne.s32.totalorder %s35, %s51
      %p53 = scmp.eq.s32.totalorder %s27, 0
      %p54 = por %p52, %p53
      %s56 = sadd.s32 %s55, 1
      %p59 = scmp.eq.s32.totalorder %s21, 1
      %p60 = scmp.ne.s32.totalorder %s55, %s57
      %p61 = scmp.eq.s32.totalorder %s21, 0
      %p62 = por %p60, %p61
      %p63 = scmp.ne.s32.totalorder %s55, %s57
      %p64 = scmp.eq.s32.totalorder %s26, 1
      %p65 = por %p63, %p64
      %p66 = scmp.ne.s32.totalorder %s57, %s58
      %p67 = scmp.eq.s32.totalorder %s26, 0
      %p68 = por %p66, %p67
      %p69 = scmp.ne.s32.totalorder %s57, %s58
      %p70 = scmp.eq.s32.totalorder %s27, 1
      %p71 = por %p69, %p70
      %p73 = scmp.ne.s32.totalorder %s58, %s72
      %p74 = scmp.eq.s32.totalorder %s27, 0
      %p75 = por %p73, %p74
      %s77 = sadd.s32 %s76, 1
      %p80 = scmp.eq.s32.totalorder %s21, 1
      %p81 = scmp.ne.s32.totalorder %s76, %s78
      %p82 = scmp.eq.s32.totalorder %s21, 0
      %p83 = por %p81, %p82
      %p84 = scmp.ne.s32.totalorder %s76, %s78
      %p85 = scmp.eq.s32.totalorder %s26, 1
      %p86 = por %p84, %p85
      %p87 = scmp.ne.s32.totalorder %s78, %s79
      %p88 = scmp.eq.s32.totalorder %s26, 0
      %p89 = por %p87, %p88
      %p90 = scmp.ne.s32.totalorder %s78, %s79
      %p91 = scmp.eq.s32.totalorder %s27, 1
      %p92 = por %p90, %p91
      %p94 = scmp.ne.s32.totalorder %s79, %s93
      %p95 = scmp.eq.s32.totalorder %s27, 0
      %p96 = por %p94, %p95
      %s98 = sadd.s32 %s97, 1
      %p101 = scmp.eq.s32.totalorder %s21, 1
      %p102 = scmp.ne.s32.totalorder %s97, %s99
      %p103 = scmp.eq.s32.totalorder %s21, 0
      %p104 = por %p102, %p103
      %p105 = scmp.ne.s32.totalorder %s97, %s99
      %p106 = scmp.eq.s32.totalorder %s26, 1
      %p107 = por %p105, %p106
      %p108 = scmp.ne.s32.totalorder %s99, %s100
      %p109 = scmp.eq.s32.totalorder %s26, 0
      %p110 = por %p108, %p109
      %p111 = scmp.ne.s32.totalorder %s99, %s100
      %p112 = scmp.eq.s32.totalorder %s27, 1
      %p113 = por %p111, %p112
      %p115 = scmp.ne.s32.totalorder %s100, %s114
      %p116 = scmp.eq.s32.totalorder %s27, 0
      %p117 = por %p115, %p116
      %s119 = sadd.s32 %s118, 1
      %p122 = scmp.eq.s32.totalorder %s21, 1
      %p123 = scmp.ne.s32.totalorder %s118, %s120
      %p124 = scmp.eq.s32.totalorder %s21, 0
      %p125 = por %p123, %p124
      %p126 = scmp.ne.s32.totalorder %s118, %s120
      %p127 = scmp.eq.s32.totalorder %s26, 1
      %p128 = por %p126, %p127
      %p129 = scmp.ne.s32.totalorder %s120, %s121
      %p130 = scmp.eq.s32.totalorder %s26, 0
      %p131 = por %p129, %p130
      %p132 = scmp.ne.s32.totalorder %s120, %s121
      %p133 = scmp.eq.s32.totalorder %s27, 1
      %p134 = por %p132, %p133
      %p136 = scmp.ne.s32.totalorder %s121, %s135
      %p137 = scmp.eq.s32.totalorder %s27, 0
      %p138 = por %p136, %p137
      %s140 = sadd.s32 %s139, 1
      %p143 = scmp.eq.s32.totalorder %s21, 1
      %p144 = scmp.ne.s32.totalorder %s139, %s141
      %p145 = scmp.eq.s32.totalorder %s21, 0
      %p146 = por %p144, %p145
      %p147 = scmp.ne.s32.totalorder %s139, %s141
      %p148 = scmp.eq.s32.totalorder %s26, 1
      %p149 = por %p147, %p148
      %p150 = scmp.ne.s32.totalorder %s141, %s142
      %p151 = scmp.eq.s32.totalorder %s26, 0
      %p152 = por %p150, %p151
      %p153 = scmp.ne.s32.totalorder %s141, %s142
      %p154 = scmp.eq.s32.totalorder %s27, 1
      %p155 = por %p153, %p154
      %p157 = scmp.ne.s32.totalorder %s142, %s156
      %p158 = scmp.eq.s32.totalorder %s27, 0
      %p159 = por %p157, %p158
      %s160 = ssub.s32 %s21, %s28
      %p161 = scmp.eq.s32.totalorder %s160, 0
      %s163 = sadd.s32 %s162, 1
      %s164 = scalar_select %p161, %s162, %s163
      %p167 = pneg %p161
      %p168 = scmp.eq.s32.totalorder %s21, 1
      %p169 = por %p167, %p168
      %p170 = scmp.ne.s32.totalorder %s162, %s165
      %p171 = scmp.eq.s32.totalorder %s21, 0
      %p172 = por %p170, %p171
      %p173 = scmp.ne.s32.totalorder %s162, %s165
      %p174 = scmp.eq.s32.totalorder %s26, 1
      %p175 = por %p173, %p174
      %p176 = scmp.ne.s32.totalorder %s165, %s166
      %p177 = scmp.eq.s32.totalorder %s26, 0
      %p178 = por %p176, %p177
      %p179 = scmp.ne.s32.totalorder %s165, %s166
      %p180 = scmp.eq.s32.totalorder %s27, 1
      %p181 = por %p179, %p180
      %p183 = scmp.ne.s32.totalorder %s166, %s182
      %p184 = scmp.eq.s32.totalorder %s27, 0
      %p185 = por %p183, %p184
      %s186 = ssub.s32 %s21, %s28
      %p187 = scmp.eq.s32.totalorder %s186, 0
      %s189 = sadd.s32 %s188, 1
      %s190 = scalar_select %p187, %s188, %s189
      %p193 = pneg %p187
      %p194 = scmp.eq.s32.totalorder %s21, 1
      %p195 = por %p193, %p194
      %p196 = scmp.ne.s32.totalorder %s188, %s191
      %p197 = scmp.eq.s32.totalorder %s21, 0
      %p198 = por %p196, %p197
      %p199 = scmp.ne.s32.totalorder %s188, %s191
      %p200 = scmp.eq.s32.totalorder %s26, 1
      %p201 = por %p199, %p200
      %p202 = scmp.ne.s32.totalorder %s191, %s192
      %p203 = scmp.eq.s32.totalorder %s26, 0
      %p204 = por %p202, %p203
      %p205 = scmp.ne.s32.totalorder %s191, %s192
      %p206 = scmp.eq.s32.totalorder %s27, 1
      %p207 = por %p205, %p206
      %p209 = scmp.ne.s32.totalorder %s192, %s208
      %p210 = scmp.eq.s32.totalorder %s27, 0
      %p211 = por %p209, %p210
      %s212 = ssub.s32 %s21, %s28
      %p213 = scmp.eq.s32.totalorder %s212, 0
      %s215 = sadd.s32 %s214, 1
      %s216 = scalar_select %p213, %s214, %s215
      %p219 = pneg %p213
      %p220 = scmp.eq.s32.totalorder %s21, 1
      %p221 = por %p219, %p220
      %p222 = scmp.ne.s32.totalorder %s214, %s217
      %p223 = scmp.eq.s32.totalorder %s21, 0
      %p224 = por %p222, %p223
      %p225 = scmp.ne.s32.totalorder %s214, %s217
      %p226 = scmp.eq.s32.totalorder %s26, 1
      %p227 = por %p225, %p226
      %p228 = scmp.ne.s32.totalorder %s217, %s218
      %p229 = scmp.eq.s32.totalorder %s26, 0
      %p230 = por %p228, %p229
      %p231 = scmp.ne.s32.totalorder %s217, %s218
      %p232 = scmp.eq.s32.totalorder %s27, 1
      %p233 = por %p231, %p232
      %p235 = scmp.ne.s32.totalorder %s218, %s234
      %p236 = scmp.eq.s32.totalorder %s27, 0
      %p237 = por %p235, %p236
      %p238 = scmp.le.s32.totalorder 1, %s21
      %p239 = scmp.lt.s32.totalorder %s21, 3
      %p240 = pnand %p238, %p239
      %p241 = pneg %p240
      // Predicated region
      $region9: #{tpu_custom_call.1} parent=5 // pred_check
        _
      $region10: #{tpu_custom_call.1} parent=5 // pred_check_branch
        %243 = sbr.rel (%p240) target = $region12
      $region11: #{tpu_custom_call.1} parent=5 // pred_region
        %s244 = ssub.s32 %s21, 1
        // Predicated region
        $region13: #{tpu_custom_call.1} parent=11 // pred_check
          %p245 = pneg %p68
        $region14: #{tpu_custom_call.1} parent=11 // pred_check_branch
          %247 = sbr.rel (%p245) target = $region16
        $region15: #{tpu_custom_call.1} parent=11 // pred_region
          _
        $region16: #{tpu_custom_call.1} parent=11 // pred_fallthru
          _
        // Predicated region
        $region17: #{tpu_custom_call.1} parent=11 // pred_check
          %p248 = pneg %p89
        $region18: #{tpu_custom_call.1} parent=11 // pred_check_branch
          %250 = sbr.rel (%p248) target = $region20
        $region19: #{tpu_custom_call.1} parent=11 // pred_region
          _
        $region20: #{tpu_custom_call.1} parent=11 // pred_fallthru
          _
        // Predicated region
        $region21: #{tpu_custom_call.1} parent=11 // pred_check
          %p251 = pneg %p110
        $region22: #{tpu_custom_call.1} parent=11 // pred_check_branch
          %253 = sbr.rel (%p251) target = $region24
        $region23: #{tpu_custom_call.1} parent=11 // pred_region
          _
        $region24: #{tpu_custom_call.1} parent=11 // pred_fallthru
          _
        // Predicated region
        $region25: #{tpu_custom_call.1} parent=11 // pred_check
          %p254 = pneg %p131
        $region26: #{tpu_custom_call.1} parent=11 // pred_check_branch
          %256 = sbr.rel (%p254) target = $region28
        $region27: #{tpu_custom_call.1} parent=11 // pred_region
          _
        $region28: #{tpu_custom_call.1} parent=11 // pred_fallthru
          _
        // Predicated region
        $region29: #{tpu_custom_call.1} parent=11 // pred_check
          %p257 = pneg %p152
        $region30: #{tpu_custom_call.1} parent=11 // pred_check_branch
          %259 = sbr.rel (%p257) target = $region32
        $region31: #{tpu_custom_call.1} parent=11 // pred_region
          _
        $region32: #{tpu_custom_call.1} parent=11 // pred_fallthru
          _
      $region12: #{tpu_custom_call.1} parent=5 // pred_fallthru
        _
      %p260 = scmp.lt.s32.totalorder %s21, 2
      // Predicated region
      $region33: #{tpu_custom_call.1} parent=5 // pred_check
        %p261 = pneg %p260
      $region34: #{tpu_custom_call.1} parent=5 // pred_check_branch
        %263 = sbr.rel (%p261) target = $region36
      $region35: #{tpu_custom_call.1} parent=5 // pred_region
        // Predicated region
        $region37: #{tpu_custom_call.1} parent=35 // pred_check
          %p264 = pneg %p41
        $region38: #{tpu_custom_call.1} parent=35 // pred_check_branch
          %266 = sbr.rel (%p264) target = $region40
        $region39: #{tpu_custom_call.1} parent=35 // pred_region
          %p267 = scmp.lt.s32.totalorder %s21, 1
          %s268 = scalar_select %p267, %s21, 1
          %s269 = smul.addr %s268, 8
          %s270 = scalar_lea.vmem %s0, %s269
        $region40: #{tpu_custom_call.1} parent=35 // pred_fallthru
          _
      $region36: #{tpu_custom_call.1} parent=5 // pred_fallthru
        _
      %p271 = scmp.le.s32.totalorder 1, %s21
      %p272 = scmp.lt.s32.totalorder %s21, 3
      %p273 = pnand %p271, %p272
      %p274 = pneg %p273
      // Predicated region
      $region41: #{tpu_custom_call.1} parent=5 // pred_check
        _
      $region42: #{tpu_custom_call.1} parent=5 // pred_check_branch
        %276 = sbr.rel (%p273) target = $region44
      $region43: #{tpu_custom_call.1} parent=5 // pred_region
        %s277 = ssub.s32 %s21, 1
        %p278 = scmp.lt.s32.totalorder %s26, 1
        %s279 = scalar_select %p278, %s26, 1
        %s280 = smul.addr %s279, 8
        %s281 = scalar_lea.vmem %s0, %s280
        %p282 = pneg %p47
        %p283 = pneg %p44
        %p284 = pneg %p68
        %p285 = pneg %p65
        %p286 = pneg %p89
        %p287 = pneg %p86
        %p288 = pneg %p110
        %p289 = pneg %p107
        %p290 = pneg %p131
        %p291 = pneg %p128
        %p292 = pneg %p152
        %p293 = pneg %p149
        %p294 = pneg %p178
        %p295 = pneg %p175
        %s296 = sand.u32 %s165, 1
        %s297 = scalar_lea.sflag [#allocation3], %s296
        %s298 = sand.u32 %s165, 1
        %s299 = smul.addr %s298, 2
        %s300 = scalar_lea.vmem [#allocation2], %s299
        %p301 = pneg %p204
        %p302 = pneg %p201
        %s303 = sand.u32 %s26, 1
        %s304 = scalar_lea.sflag [#allocation5], %s303
        %s305 = sand.u32 %s191, 1
        %s306 = smul.addr %s305, 8
        %s307 = scalar_lea.vmem [#allocation4], %s306
        %p308 = pneg %p230
        %p309 = pneg %p227
        %s310 = sand.u32 %s26, 1
        %s311 = scalar_lea.sflag [#allocation5], %s310
        %s312 = sand.u32 %s217, 1
        %s313 = smul.addr %s312, 8
        %s314 = scalar_lea.vmem [#allocation6], %s313
        %p315 = scmp.lt.s32.totalorder %s26, 1
        %s316 = scalar_select %p315, %s26, 1
        %s317 = smul.addr %s316, 8
        %s318 = scalar_lea.vmem %s0, %s317
        %v319 = vld [vmem:[%s318] sm:$0xff]
        %v320 = vld [vmem:[%s2] sm:$0xff]
        %v321 = vld [vmem:[%s2 + $0x8] sm:$0xff]
        %v322 = vld [vmem:[%s2 + $0x10] sm:$0xff]
        %v323 = vld [vmem:[%s2 + $0x18] sm:$0xff]
        %v324 = vld [vmem:[%s2 + $0x20] sm:$0xff]
        %v325 = vld [vmem:[%s2 + $0x28] sm:$0xff]
        %v326 = vld [vmem:[%s2 + $0x30] sm:$0xff]
        %v327 = vld [vmem:[%s2 + $0x38] sm:$0xff]
        %v328 = vld [vmem:[%s4] sm:$0x7]
        %v329 = vld [vmem:[%s5] sm:$0x7]
        %vm330 = vcmask 261120
        %v332 = vsel %vm330, %v320, 0
        %v335 = vsel %vm330, %v321, 0
        %v338 = vsel %vm330, %v322, 0
        %v341 = vsel %vm330, %v323, 0
        %v344 = vsel %vm330, %v324, 0
        %v347 = vsel %vm330, %v325, 0
        %v350 = vsel %vm330, %v326, 0
        %v353 = vsel %vm330, %v327, 0
        %v356 = vsel %vm330, %v319, 0
        %358 = vmatprep.subr.mxu0 0.0
        %359 = vmatpush1.xpose.msra.mxu0 %v356
        %360 = vmatprep.subr.mxu0 0.0
        %361 = vmatpush1.xpose.msra.mxu0 0.0
        %362 = vmatprep.subr.mxu0 0.0
        %363 = vmatpush1.xpose.msra.mxu0 0.0
        %364 = vmatprep.subr.mxu0 0.0
        %365 = vmatpush1.xpose.msra.mxu0 0.0
        %366 = vmatprep.subr.mxu0 0.0
        %367 = vmatpush1.xpose.msra.mxu0 0.0
        %368 = vmatprep.subr.mxu0 0.0
        %369 = vmatpush1.xpose.msra.mxu0 0.0
        %370 = vmatprep.subr.mxu0 0.0
        %371 = vmatpush1.xpose.msra.mxu0 0.0
        %372 = vmatprep.subr.mxu0 0.0
        %373 = vmatpush1.xpose.msra.mxu0 0.0
        %374 = vmatprep.subr.mxu0 0.0
        %375 = vmatpush1.xpose.msra.mxu0 0.0
        %376 = vmatprep.subr.mxu0 0.0
        %377 = vmatpush1.xpose.msra.mxu0 0.0
        %378 = vmatprep.subr.mxu0 0.0
        %379 = vmatpush1.xpose.msra.mxu0 0.0
        %380 = vmatprep.subr.mxu0 0.0
        %381 = vmatpush1.xpose.msra.mxu0 0.0
        %382 = vmatprep.subr.mxu0 0.0
        %383 = vmatpush1.xpose.msra.mxu0 0.0
        %384 = vmatprep.subr.mxu0 0.0
        %385 = vmatpush1.xpose.msra.mxu0 0.0
        %386 = vmatprep.subr.mxu0 0.0
        %387 = vmatpush1.xpose.msra.mxu0 0.0
        %388 = vmatprep.subr.mxu0 0.0
        %389 = vmatpush1.xpose.msra.mxu0 0.0
        %390 = vmatprep.subr.mxu0 0.0
        %391 = vmatpush1.xpose.msra.mxu0 0.0
        %392 = vmatprep.subr.mxu0 0.0
        %393 = vmatpush1.xpose.msra.mxu0 0.0
        %394 = vmatprep.subr.mxu0 0.0
        %395 = vmatpush1.xpose.msra.mxu0 0.0
        %396 = vmatprep.subr.mxu0 0.0
        %397 = vmatpush1.xpose.msra.mxu0 0.0
        %398 = vmatprep.subr.mxu0 0.0
        %399 = vmatpush1.xpose.msra.mxu0 0.0
        %400 = vmatprep.subr.mxu0 0.0
        %401 = vmatpush1.xpose.msra.mxu0 0.0
        %402 = vmatprep.subr.mxu0 0.0
        %403 = vmatpush1.xpose.msra.mxu0 0.0
        %404 = vmatprep.subr.mxu0 0.0
        %405 = vmatpush1.xpose.msra.mxu0 0.0
        %406 = vmatprep.subr.mxu0 0.0
        %407 = vmatpush1.xpose.msra.mxu0 0.0
        %408 = vmatprep.subr.mxu0 0.0
        %409 = vmatpush1.xpose.msra.mxu0 0.0
        %410 = vmatprep.subr.mxu0 0.0
        %411 = vmatpush1.xpose.msra.mxu0 0.0
        %412 = vmatprep.subr.mxu0 0.0
        %413 = vmatpush1.xpose.msra.mxu0 0.0
        %414 = vmatprep.subr.mxu0 0.0
        %415 = vmatpush1.xpose.msra.mxu0 0.0
        %416 = vmatprep.subr.mxu0 0.0
        %417 = vmatpush1.xpose.msra.mxu0 0.0
        %418 = vmatprep.subr.mxu0 0.0
        %419 = vmatpush1.xpose.msra.mxu0 0.0
        %420 = vmatprep.subr.mxu0 0.0
        %421 = vmatpush1.xpose.msra.mxu0 0.0
        %422 = vmatprep.mubr.f32.mxu0 0.0
        %423 = vmatmul.mubr.f32.gmra.mrb[0].mxu0 %v332
        %v424 = vpop.f32.mrb[0].mxu0
        %v425 = vadd.f32 0.0, %v424
        %v426 = vpop.f32.mrb[0].mxu0
        %427 = vmatprep.mubr.f32.mxu0 0.0
        %428 = vmatmul.mubr.f32.gmra.mrb[0].mxu0 %v335
        %v429 = vpop.f32.mrb[0].mxu0
        %v430 = vadd.f32 0.0, %v429
        %v431 = vpop.f32.mrb[0].mxu0
        %432 = vmatprep.mubr.f32.mxu0 0.0
        %433 = vmatmul.mubr.f32.gmra.mrb[0].mxu0 %v338
        %v434 = vpop.f32.mrb[0].mxu0
        %v435 = vadd.f32 0.0, %v434
        %v436 = vpop.f32.mrb[0].mxu0
        %437 = vmatprep.mubr.f32.mxu0 0.0
        %438 = vmatmul.mubr.f32.gmra.mrb[0].mxu0 %v341
        %v439 = vpop.f32.mrb[0].mxu0
        %v440 = vadd.f32 0.0, %v439
        %v441 = vpop.f32.mrb[0].mxu0
        %442 = vmatprep.mubr.f32.mxu0 0.0
        %443 = vmatmul.mubr.f32.gmra.mrb[0].mxu0 %v344
        %v444 = vpop.f32.mrb[0].mxu0
        %v445 = vadd.f32 0.0, %v444
        %v446 = vpop.f32.mrb[0].mxu0
        %447 = vmatprep.mubr.f32.mxu0 0.0
        %448 = vmatmul.mubr.f32.gmra.mrb[0].mxu0 %v347
        %v449 = vpop.f32.mrb[0].mxu0
        %v450 = vadd.f32 0.0, %v449
        %v451 = vpop.f32.mrb[0].mxu0
        %452 = vmatprep.mubr.f32.mxu0 0.0
        %453 = vmatmul.mubr.f32.gmra.mrb[0].mxu0 %v350
        %v454 = vpop.f32.mrb[0].mxu0
        %v455 = vadd.f32 0.0, %v454
        %v456 = vpop.f32.mrb[0].mxu0
        %457 = vmatprep.mubr.f32.mxu0 0.0
        %458 = vmatmul.mubr.f32.gmra.mrb[0].mxu0 %v353
        %v459 = vpop.f32.mrb[0].mxu0
        %v460 = vadd.f32 0.0, %v459
        %v461 = vpop.f32.mrb[0].mxu0
        %462 = vdwg.mxu0
        %v463 = vld [vmem:[%s1] sm:$0xff]
        %v464 = vld [vmem:[%s1 + $0x8] sm:$0xff]
        %v465 = vld [vmem:[%s1 + $0x10] sm:$0xff]
        %v466 = vld [vmem:[%s1 + $0x18] sm:$0xff]
        %v467 = vld [vmem:[%s3] sm:$0xff]
        %v468 = vld [vmem:[%s3 + $0x8] sm:$0xff]
        %v469 = vld [vmem:[%s3 + $0x10] sm:$0xff]
        %v470 = vld [vmem:[%s3 + $0x18] sm:$0xff]
        %v471 = vld [vmem:[%s3 + $0x20] sm:$0xff]
        %v472 = vld [vmem:[%s3 + $0x28] sm:$0xff]
        %v473 = vld [vmem:[%s3 + $0x30] sm:$0xff]
        %v474 = vld [vmem:[%s3 + $0x38] sm:$0xff]
        %476 = vset.pattern.permute.xlu0 0
        %477 = vperm.xlu0 %476, %v467
        %v478 = vpop.permute.xlu0 %477
        %481 = vset.pattern.permute.xlu0 0
        %482 = vperm.xlu0 %481, %v468
        %v483 = vpop.permute.xlu0 %482
        %486 = vset.pattern.permute.xlu0 0
        %487 = vperm.xlu0 %486, %v469
        %v488 = vpop.permute.xlu0 %487
        %491 = vset.pattern.permute.xlu0 0
        %492 = vperm.xlu0 %491, %v470
        %v493 = vpop.permute.xlu0 %492
        %496 = vset.pattern.permute.xlu0 0
        %497 = vperm.xlu0 %496, %v471
        %v498 = vpop.permute.xlu0 %497
        %501 = vset.pattern.permute.xlu0 0
        %502 = vperm.xlu0 %501, %v472
        %v503 = vpop.permute.xlu0 %502
        %506 = vset.pattern.permute.xlu0 0
        %507 = vperm.xlu0 %506, %v473
        %v508 = vpop.permute.xlu0 %507
        %511 = vset.pattern.permute.xlu0 0
        %512 = vperm.xlu0 %511, %v474
        %v513 = vpop.permute.xlu0 %512
        %515 = vmatprep.subr.mxu0 0.0
        %516 = vmatpush1.msra.mxu0 %v463
        %517 = vmatprep.subr.mxu0 0.0
        %518 = vmatpush1.msra.mxu0 %v464
        %519 = vmatprep.subr.mxu0 0.0
        %520 = vmatpush1.msra.mxu0 %v465
        %521 = vmatprep.subr.mxu0 0.0
        %522 = vmatpush1.msra.mxu0 %v466
        %523 = vmatprep.subr.mxu0 0.0
        %524 = vmatpush1.msra.mxu0 0.0
        %525 = vmatprep.subr.mxu0 0.0
        %526 = vmatpush1.msra.mxu0 0.0
        %527 = vmatprep.subr.mxu0 0.0
        %528 = vmatpush1.msra.mxu0 0.0
        %529 = vmatprep.subr.mxu0 0.0
        %530 = vmatpush1.msra.mxu0 0.0
        %531 = vmatprep.subr.mxu0 0.0
        %532 = vmatpush1.msra.mxu0 0.0
        %533 = vmatprep.subr.mxu0 0.0
        %534 = vmatpush1.msra.mxu0 0.0
        %535 = vmatprep.subr.mxu0 0.0
        %536 = vmatpush1.msra.mxu0 0.0
        %537 = vmatprep.subr.mxu0 0.0
        %538 = vmatpush1.msra.mxu0 0.0
        %539 = vmatprep.subr.mxu0 0.0
        %540 = vmatpush1.msra.mxu0 0.0
        %541 = vmatprep.subr.mxu0 0.0
        %542 = vmatpush1.msra.mxu0 0.0
        %543 = vmatprep.subr.mxu0 0.0
        %544 = vmatpush1.msra.mxu0 0.0
        %545 = vmatprep.subr.mxu0 0.0
        %546 = vmatpush1.msra.mxu0 0.0
        %547 = vmatprep.subr.mxu0 0.0
        %548 = vmatpush1.msra.mxu0 0.0
        %549 = vmatprep.subr.mxu0 0.0
        %550 = vmatpush1.msra.mxu0 0.0
        %551 = vmatprep.subr.mxu0 0.0
        %552 = vmatpush1.msra.mxu0 0.0
        %553 = vmatprep.subr.mxu0 0.0
        %554 = vmatpush1.msra.mxu0 0.0
        %555 = vmatprep.subr.mxu0 0.0
        %556 = vmatpush1.msra.mxu0 0.0
        %557 = vmatprep.subr.mxu0 0.0
        %558 = vmatpush1.msra.mxu0 0.0
        %559 = vmatprep.subr.mxu0 0.0
        %560 = vmatpush1.msra.mxu0 0.0
        %561 = vmatprep.subr.mxu0 0.0
        %562 = vmatpush1.msra.mxu0 0.0
        %563 = vmatprep.subr.mxu0 0.0
        %564 = vmatpush1.msra.mxu0 0.0
        %565 = vmatprep.subr.mxu0 0.0
        %566 = vmatpush1.msra.mxu0 0.0
        %567 = vmatprep.subr.mxu0 0.0
        %568 = vmatpush1.msra.mxu0 0.0
        %569 = vmatprep.subr.mxu0 0.0
        %570 = vmatpush1.msra.mxu0 0.0
        %571 = vmatprep.subr.mxu0 0.0
        %572 = vmatpush1.msra.mxu0 0.0
        %573 = vmatprep.subr.mxu0 0.0
        %574 = vmatpush1.msra.mxu0 0.0
        %575 = vmatprep.subr.mxu0 0.0
        %576 = vmatpush1.msra.mxu0 0.0
        %577 = vmatprep.subr.mxu0 0.0
        %578 = vmatpush1.msra.mxu0 0.0
        %579 = vmatprep.mubr.f32.mxu0 0.0
        %580 = vmatmul.mubr.f32.gmra.mrb[0].mxu0 %v332
        %v581 = vpop.f32.mrb[0].mxu0
        %v582 = vadd.f32 %v478, %v581
        %v583 = vpop.f32.mrb[0].mxu0
        %584 = vmatprep.mubr.f32.mxu0 0.0
        %585 = vmatmul.mubr.f32.gmra.mrb[0].mxu0 %v335
        %v586 = vpop.f32.mrb[0].mxu0
        %v587 = vadd.f32 %v483, %v586
        %v588 = vpop.f32.mrb[0].mxu0
        %589 = vmatprep.mubr.f32.mxu0 0.0
        %590 = vmatmul.mubr.f32.gmra.mrb[0].mxu0 %v338
        %v591 = vpop.f32.mrb[0].mxu0
        %v592 = vadd.f32 %v488, %v591
        %v593 = vpop.f32.mrb[0].mxu0
        %594 = vmatprep.mubr.f32.mxu0 0.0
        %595 = vmatmul.mubr.f32.gmra.mrb[0].mxu0 %v341
        %v596 = vpop.f32.mrb[0].mxu0
        %v597 = vadd.f32 %v493, %v596
        %v598 = vpop.f32.mrb[0].mxu0
        %599 = vmatprep.mubr.f32.mxu0 0.0
        %600 = vmatmul.mubr.f32.gmra.mrb[0].mxu0 %v344
        %v601 = vpop.f32.mrb[0].mxu0
        %v602 = vadd.f32 %v498, %v601
        %v603 = vpop.f32.mrb[0].mxu0
        %604 = vmatprep.mubr.f32.mxu0 0.0
        %605 = vmatmul.mubr.f32.gmra.mrb[0].mxu0 %v347
        %v606 = vpop.f32.mrb[0].mxu0
        %v607 = vadd.f32 %v503, %v606
        %v608 = vpop.f32.mrb[0].mxu0
        %609 = vmatprep.mubr.f32.mxu0 0.0
        %610 = vmatmul.mubr.f32.gmra.mrb[0].mxu0 %v350
        %v611 = vpop.f32.mrb[0].mxu0
        %v612 = vadd.f32 %v508, %v611
        %v613 = vpop.f32.mrb[0].mxu0
        %614 = vmatprep.mubr.f32.mxu0 0.0
        %615 = vmatmul.mubr.f32.gmra.mrb[0].mxu0 %v353
        %v616 = vpop.f32.mrb[0].mxu0
        %v617 = vadd.f32 %v513, %v616
        %v618 = vpop.f32.mrb[0].mxu0
        %619 = vdwg.mxu0
        %621 = vset.pattern.permute.xlu0 0
        %622 = vperm.xlu0 %621, %v425
        %v623 = vpop.permute.xlu0 %622
        %626 = vset.pattern.permute.xlu0 0
        %627 = vperm.xlu0 %626, %v430
        %v628 = vpop.permute.xlu0 %627
        %631 = vset.pattern.permute.xlu0 0
        %632 = vperm.xlu0 %631, %v435
        %v633 = vpop.permute.xlu0 %632
        %636 = vset.pattern.permute.xlu0 0
        %637 = vperm.xlu0 %636, %v440
        %v638 = vpop.permute.xlu0 %637
        %641 = vset.pattern.permute.xlu0 0
        %642 = vperm.xlu0 %641, %v445
        %v643 = vpop.permute.xlu0 %642
        %646 = vset.pattern.permute.xlu0 0
        %647 = vperm.xlu0 %646, %v450
        %v648 = vpop.permute.xlu0 %647
        %651 = vset.pattern.permute.xlu0 0
        %652 = vperm.xlu0 %651, %v455
        %v653 = vpop.permute.xlu0 %652
        %656 = vset.pattern.permute.xlu0 0
        %657 = vperm.xlu0 %656, %v460
        %v658 = vpop.permute.xlu0 %657
        %v660 = vadd.f32 %v623, %v582
        %v661 = vadd.f32 %v628, %v587
        %v662 = vadd.f32 %v633, %v592
        %v663 = vadd.f32 %v638, %v597
        %v664 = vadd.f32 %v643, %v602
        %v665 = vadd.f32 %v648, %v607
        %v666 = vadd.f32 %v653, %v612
        %v667 = vadd.f32 %v658, %v617
        %v668 = vmax.f32 %v660, 0.0
        %v669 = vmax.f32 %v661, 0.0
        %v670 = vmax.f32 %v662, 0.0
        %v671 = vmax.f32 %v663, 0.0
        %v672 = vmax.f32 %v664, 0.0
        %v673 = vmax.f32 %v665, 0.0
        %v674 = vmax.f32 %v666, 0.0
        %v675 = vmax.f32 %v667, 0.0
        %677 = vset.pattern.permute.xlu0 0
        %678 = vperm.xlu0 %677, %v329
        %v679 = vpop.permute.xlu0 %678
        %vm681 = vcmask 523264
        %v683 = vsel %vm681, %v328, 0
        %685 = vmatprep.subr.mxu0 0.0
        %686 = vmatpush1.msra.mxu0 %v668
        %687 = vmatprep.subr.mxu0 0.0
        %688 = vmatpush1.msra.mxu0 %v669
        %689 = vmatprep.subr.mxu0 0.0
        %690 = vmatpush1.msra.mxu0 %v670
        %691 = vmatprep.subr.mxu0 0.0
        %692 = vmatpush1.msra.mxu0 %v671
        %693 = vmatprep.subr.mxu0 0.0
        %694 = vmatpush1.msra.mxu0 %v672
        %695 = vmatprep.subr.mxu0 0.0
        %696 = vmatpush1.msra.mxu0 %v673
        %697 = vmatprep.subr.mxu0 0.0
        %698 = vmatpush1.msra.mxu0 %v674
        %699 = vmatprep.subr.mxu0 0.0
        %700 = vmatpush1.msra.mxu0 %v675
        %701 = vmatprep.subr.mxu0 0.0
        %702 = vmatpush1.msra.mxu0 0.0
        %703 = vmatprep.subr.mxu0 0.0
        %704 = vmatpush1.msra.mxu0 0.0
        %705 = vmatprep.subr.mxu0 0.0
        %706 = vmatpush1.msra.mxu0 0.0
        %707 = vmatprep.subr.mxu0 0.0
        %708 = vmatpush1.msra.mxu0 0.0
        %709 = vmatprep.subr.mxu0 0.0
        %710 = vmatpush1.msra.mxu0 0.0
        %711 = vmatprep.subr.mxu0 0.0
        %712 = vmatpush1.msra.mxu0 0.0
        %713 = vmatprep.subr.mxu0 0.0
        %714 = vmatpush1.msra.mxu0 0.0
        %715 = vmatprep.subr.mxu0 0.0
        %716 = vmatpush1.msra.mxu0 0.0
        %717 = vmatprep.subr.mxu0 0.0
        %718 = vmatpush1.msra.mxu0 0.0
        %719 = vmatprep.subr.mxu0 0.0
        %720 = vmatpush1.msra.mxu0 0.0
        %721 = vmatprep.subr.mxu0 0.0
        %722 = vmatpush1.msra.mxu0 0.0
        %723 = vmatprep.subr.mxu0 0.0
        %724 = vmatpush1.msra.mxu0 0.0
        %725 = vmatprep.subr.mxu0 0.0
        %726 = vmatpush1.msra.mxu0 0.0
        %727 = vmatprep.subr.mxu0 0.0
        %728 = vmatpush1.msra.mxu0 0.0
        %729 = vmatprep.subr.mxu0 0.0
        %730 = vmatpush1.msra.mxu0 0.0
        %731 = vmatprep.subr.mxu0 0.0
        %732 = vmatpush1.msra.mxu0 0.0
        %733 = vmatprep.subr.mxu0 0.0
        %734 = vmatpush1.msra.mxu0 0.0
        %735 = vmatprep.subr.mxu0 0.0
        %736 = vmatpush1.msra.mxu0 0.0
        %737 = vmatprep.subr.mxu0 0.0
        %738 = vmatpush1.msra.mxu0 0.0
        %739 = vmatprep.subr.mxu0 0.0
        %740 = vmatpush1.msra.mxu0 0.0
        %741 = vmatprep.subr.mxu0 0.0
        %742 = vmatpush1.msra.mxu0 0.0
        %743 = vmatprep.subr.mxu0 0.0
        %744 = vmatpush1.msra.mxu0 0.0
        %745 = vmatprep.subr.mxu0 0.0
        %746 = vmatpush1.msra.mxu0 0.0
        %747 = vmatprep.subr.mxu0 0.0
        %748 = vmatpush1.msra.mxu0 0.0
        %749 = vmatprep.mubr.f32.mxu0 0.0
        %750 = vmatmul.mubr.f32.gmra.mrb[0].mxu0 %v683
        %v751 = vpop.f32.mrb[0].mxu0
        %v752 = vadd.f32 %v679, %v751
        %v753 = vpop.f32.mrb[0].mxu0
        %754 = vdwg.mxu0
        %755 = vset.pattern.permute.xlu0 1
        %756 = vperm.xlu0 %755, %v425
        %v757 = vpop.permute.xlu0 %756
        %759 = vset.pattern.permute.xlu0 1
        %760 = vperm.xlu0 %759, %v430
        %v761 = vpop.permute.xlu0 %760
        %763 = vset.pattern.permute.xlu0 1
        %764 = vperm.xlu0 %763, %v435
        %v765 = vpop.permute.xlu0 %764
        %767 = vset.pattern.permute.xlu0 1
        %768 = vperm.xlu0 %767, %v440
        %v769 = vpop.permute.xlu0 %768
        %771 = vset.pattern.permute.xlu0 1
        %772 = vperm.xlu0 %771, %v445
        %v773 = vpop.permute.xlu0 %772
        %775 = vset.pattern.permute.xlu0 1
        %776 = vperm.xlu0 %775, %v450
        %v777 = vpop.permute.xlu0 %776
        %779 = vset.pattern.permute.xlu0 1
        %780 = vperm.xlu0 %779, %v455
        %v781 = vpop.permute.xlu0 %780
        %783 = vset.pattern.permute.xlu0 1
        %784 = vperm.xlu0 %783, %v460
        %v785 = vpop.permute.xlu0 %784
        %v787 = vadd.f32 %v757, %v582
        %v788 = vadd.f32 %v761, %v587
        %v789 = vadd.f32 %v765, %v592
        %v790 = vadd.f32 %v769, %v597
        %v791 = vadd.f32 %v773, %v602
        %v792 = vadd.f32 %v777, %v607
        %v793 = vadd.f32 %v781, %v612
        %v794 = vadd.f32 %v785, %v617
        %v795 = vmax.f32 %v787, 0.0
        %v796 = vmax.f32 %v788, 0.0
        %v797 = vmax.f32 %v789, 0.0
        %v798 = vmax.f32 %v790, 0.0
        %v799 = vmax.f32 %v791, 0.0
        %v800 = vmax.f32 %v792, 0.0
        %v801 = vmax.f32 %v793, 0.0
        %v802 = vmax.f32 %v794, 0.0
        %803 = vmatprep.subr.mxu0 0.0
        %804 = vmatpush1.msra.mxu0 %v795
        %805 = vmatprep.subr.mxu0 0.0
        %806 = vmatpush1.msra.mxu0 %v796
        %807 = vmatprep.subr.mxu0 0.0
        %808 = vmatpush1.msra.mxu0 %v797
        %809 = vmatprep.subr.mxu0 0.0
        %810 = vmatpush1.msra.mxu0 %v798
        %811 = vmatprep.subr.mxu0 0.0
        %812 = vmatpush1.msra.mxu0 %v799
        %813 = vmatprep.subr.mxu0 0.0
        %814 = vmatpush1.msra.mxu0 %v800
        %815 = vmatprep.subr.mxu0 0.0
        %816 = vmatpush1.msra.mxu0 %v801
        %817 = vmatprep.subr.mxu0 0.0
        %818 = vmatpush1.msra.mxu0 %v802
        %819 = vmatprep.subr.mxu0 0.0
        %820 = vmatpush1.msra.mxu0 0.0
        %821 = vmatprep.subr.mxu0 0.0
        %822 = vmatpush1.msra.mxu0 0.0
        %823 = vmatprep.subr.mxu0 0.0
        %824 = vmatpush1.msra.mxu0 0.0
        %825 = vmatprep.subr.mxu0 0.0
        %826 = vmatpush1.msra.mxu0 0.0
        %827 = vmatprep.subr.mxu0 0.0
        %828 = vmatpush1.msra.mxu0 0.0
        %829 = vmatprep.subr.mxu0 0.0
        %830 = vmatpush1.msra.mxu0 0.0
        %831 = vmatprep.subr.mxu0 0.0
        %832 = vmatpush1.msra.mxu0 0.0
        %833 = vmatprep.subr.mxu0 0.0
        %834 = vmatpush1.msra.mxu0 0.0
        %835 = vmatprep.subr.mxu0 0.0
        %836 = vmatpush1.msra.mxu0 0.0
        %837 = vmatprep.subr.mxu0 0.0
        %838 = vmatpush1.msra.mxu0 0.0
        %839 = vmatprep.subr.mxu0 0.0
        %840 = vmatpush1.msra.mxu0 0.0
        %841 = vmatprep.subr.mxu0 0.0
        %842 = vmatpush1.msra.mxu0 0.0
        %843 = vmatprep.subr.mxu0 0.0
        %844 = vmatpush1.msra.mxu0 0.0
        %845 = vmatprep.subr.mxu0 0.0
        %846 = vmatpush1.msra.mxu0 0.0
        %847 = vmatprep.subr.mxu0 0.0
        %848 = vmatpush1.msra.mxu0 0.0
        %849 = vmatprep.subr.mxu0 0.0
        %850 = vmatpush1.msra.mxu0 0.0
        %851 = vmatprep.subr.mxu0 0.0
        %852 = vmatpush1.msra.mxu0 0.0
        %853 = vmatprep.subr.mxu0 0.0
        %854 = vmatpush1.msra.mxu0 0.0
        %855 = vmatprep.subr.mxu0 0.0
        %856 = vmatpush1.msra.mxu0 0.0
        %857 = vmatprep.subr.mxu0 0.0
        %858 = vmatpush1.msra.mxu0 0.0
        %859 = vmatprep.subr.mxu0 0.0
        %860 = vmatpush1.msra.mxu0 0.0
        %861 = vmatprep.subr.mxu0 0.0
        %862 = vmatpush1.msra.mxu0 0.0
        %863 = vmatprep.subr.mxu0 0.0
        %864 = vmatpush1.msra.mxu0 0.0
        %865 = vmatprep.subr.mxu0 0.0
        %866 = vmatpush1.msra.mxu0 0.0
        %867 = vmatprep.mubr.f32.mxu0 0.0
        %868 = vmatmul.mubr.f32.gmra.mrb[0].mxu0 %v683
        %v869 = vpop.f32.mrb[0].mxu0
        %v870 = vadd.f32 %v679, %v869
        %v871 = vpop.f32.mrb[0].mxu0
        %872 = vdwg.mxu0
        %873 = vset.pattern.permute.xlu0 2
        %874 = vperm.xlu0 %873, %v425
        %v875 = vpop.permute.xlu0 %874
        %877 = vset.pattern.permute.xlu0 2
        %878 = vperm.xlu0 %877, %v430
        %v879 = vpop.permute.xlu0 %878
        %881 = vset.pattern.permute.xlu0 2
        %882 = vperm.xlu0 %881, %v435
        %v883 = vpop.permute.xlu0 %882
        %885 = vset.pattern.permute.xlu0 2
        %886 = vperm.xlu0 %885, %v440
        %v887 = vpop.permute.xlu0 %886
        %889 = vset.pattern.permute.xlu0 2
        %890 = vperm.xlu0 %889, %v445
        %v891 = vpop.permute.xlu0 %890
        %893 = vset.pattern.permute.xlu0 2
        %894 = vperm.xlu0 %893, %v450
        %v895 = vpop.permute.xlu0 %894
        %897 = vset.pattern.permute.xlu0 2
        %898 = vperm.xlu0 %897, %v455
        %v899 = vpop.permute.xlu0 %898
        %901 = vset.pattern.permute.xlu0 2
        %902 = vperm.xlu0 %901, %v460
        %v903 = vpop.permute.xlu0 %902
        %v905 = vadd.f32 %v875, %v582
        %v906 = vadd.f32 %v879, %v587
        %v907 = vadd.f32 %v883, %v592
        %v908 = vadd.f32 %v887, %v597
        %v909 = vadd.f32 %v891, %v602
        %v910 = vadd.f32 %v895, %v607
        %v911 = vadd.f32 %v899, %v612
        %v912 = vadd.f32 %v903, %v617
        %v913 = vmax.f32 %v905, 0.0
        %v914 = vmax.f32 %v906, 0.0
        %v915 = vmax.f32 %v907, 0.0
        %v916 = vmax.f32 %v908, 0.0
        %v917 = vmax.f32 %v909, 0.0
        %v918 = vmax.f32 %v910, 0.0
        %v919 = vmax.f32 %v911, 0.0
        %v920 = vmax.f32 %v912, 0.0
        %921 = vmatprep.subr.mxu0 0.0
        %922 = vmatpush1.msra.mxu0 %v913
        %923 = vmatprep.subr.mxu0 0.0
        %924 = vmatpush1.msra.mxu0 %v914
        %925 = vmatprep.subr.mxu0 0.0
        %926 = vmatpush1.msra.mxu0 %v915
        %927 = vmatprep.subr.mxu0 0.0
        %928 = vmatpush1.msra.mxu0 %v916
        %929 = vmatprep.subr.mxu0 0.0
        %930 = vmatpush1.msra.mxu0 %v917
        %931 = vmatprep.subr.mxu0 0.0
        %932 = vmatpush1.msra.mxu0 %v918
        %933 = vmatprep.subr.mxu0 0.0
        %934 = vmatpush1.msra.mxu0 %v919
        %935 = vmatprep.subr.mxu0 0.0
        %936 = vmatpush1.msra.mxu0 %v920
        %937 = vmatprep.subr.mxu0 0.0
        %938 = vmatpush1.msra.mxu0 0.0
        %939 = vmatprep.subr.mxu0 0.0
        %940 = vmatpush1.msra.mxu0 0.0
        %941 = vmatprep.subr.mxu0 0.0
        %942 = vmatpush1.msra.mxu0 0.0
        %943 = vmatprep.subr.mxu0 0.0
        %944 = vmatpush1.msra.mxu0 0.0
        %945 = vmatprep.subr.mxu0 0.0
        %946 = vmatpush1.msra.mxu0 0.0
        %947 = vmatprep.subr.mxu0 0.0
        %948 = vmatpush1.msra.mxu0 0.0
        %949 = vmatprep.subr.mxu0 0.0
        %950 = vmatpush1.msra.mxu0 0.0
        %951 = vmatprep.subr.mxu0 0.0
        %952 = vmatpush1.msra.mxu0 0.0
        %953 = vmatprep.subr.mxu0 0.0
        %954 = vmatpush1.msra.mxu0 0.0
        %955 = vmatprep.subr.mxu0 0.0
        %956 = vmatpush1.msra.mxu0 0.0
        %957 = vmatprep.subr.mxu0 0.0
        %958 = vmatpush1.msra.mxu0 0.0
        %959 = vmatprep.subr.mxu0 0.0
        %960 = vmatpush1.msra.mxu0 0.0
        %961 = vmatprep.subr.mxu0 0.0
        %962 = vmatpush1.msra.mxu0 0.0
        %963 = vmatprep.subr.mxu0 0.0
        %964 = vmatpush1.msra.mxu0 0.0
        %965 = vmatprep.subr.mxu0 0.0
        %966 = vmatpush1.msra.mxu0 0.0
        %967 = vmatprep.subr.mxu0 0.0
        %968 = vmatpush1.msra.mxu0 0.0
        %969 = vmatprep.subr.mxu0 0.0
        %970 = vmatpush1.msra.mxu0 0.0
        %971 = vmatprep.subr.mxu0 0.0
        %972 = vmatpush1.msra.mxu0 0.0
        %973 = vmatprep.subr.mxu0 0.0
        %974 = vmatpush1.msra.mxu0 0.0
        %975 = vmatprep.subr.mxu0 0.0
        %976 = vmatpush1.msra.mxu0 0.0
        %977 = vmatprep.subr.mxu0 0.0
        %978 = vmatpush1.msra.mxu0 0.0
        %979 = vmatprep.subr.mxu0 0.0
        %980 = vmatpush1.msra.mxu0 0.0
        %981 = vmatprep.subr.mxu0 0.0
        %982 = vmatpush1.msra.mxu0 0.0
        %983 = vmatprep.subr.mxu0 0.0
        %984 = vmatpush1.msra.mxu0 0.0
        %985 = vmatprep.mubr.f32.mxu0 0.0
        %986 = vmatmul.mubr.f32.gmra.mrb[0].mxu0 %v683
        %v987 = vpop.f32.mrb[0].mxu0
        %v988 = vadd.f32 %v679, %v987
        %v989 = vpop.f32.mrb[0].mxu0
        %990 = vdwg.mxu0
        %991 = vset.pattern.permute.xlu0 3
        %992 = vperm.xlu0 %991, %v425
        %v993 = vpop.permute.xlu0 %992
        %995 = vset.pattern.permute.xlu0 3
        %996 = vperm.xlu0 %995, %v430
        %v997 = vpop.permute.xlu0 %996
        %999 = vset.pattern.permute.xlu0 3
        %1000 = vperm.xlu0 %999, %v435
        %v1001 = vpop.permute.xlu0 %1000
        %1003 = vset.pattern.permute.xlu0 3
        %1004 = vperm.xlu0 %1003, %v440
        %v1005 = vpop.permute.xlu0 %1004
        %1007 = vset.pattern.permute.xlu0 3
        %1008 = vperm.xlu0 %1007, %v445
        %v1009 = vpop.permute.xlu0 %1008
        %1011 = vset.pattern.permute.xlu0 3
        %1012 = vperm.xlu0 %1011, %v450
        %v1013 = vpop.permute.xlu0 %1012
        %1015 = vset.pattern.permute.xlu0 3
        %1016 = vperm.xlu0 %1015, %v455
        %v1017 = vpop.permute.xlu0 %1016
        %1019 = vset.pattern.permute.xlu0 3
        %1020 = vperm.xlu0 %1019, %v460
        %v1021 = vpop.permute.xlu0 %1020
        %v1023 = vadd.f32 %v993, %v582
        %v1024 = vadd.f32 %v997, %v587
        %v1025 = vadd.f32 %v1001, %v592
        %v1026 = vadd.f32 %v1005, %v597
        %v1027 = vadd.f32 %v1009, %v602
        %v1028 = vadd.f32 %v1013, %v607
        %v1029 = vadd.f32 %v1017, %v612
        %v1030 = vadd.f32 %v1021, %v617
        %v1031 = vmax.f32 %v1023, 0.0
        %v1032 = vmax.f32 %v1024, 0.0
        %v1033 = vmax.f32 %v1025, 0.0
        %v1034 = vmax.f32 %v1026, 0.0
        %v1035 = vmax.f32 %v1027, 0.0
        %v1036 = vmax.f32 %v1028, 0.0
        %v1037 = vmax.f32 %v1029, 0.0
        %v1038 = vmax.f32 %v1030, 0.0
        %1039 = vmatprep.subr.mxu0 0.0
        %1040 = vmatpush1.msra.mxu0 %v1031
        %1041 = vmatprep.subr.mxu0 0.0
        %1042 = vmatpush1.msra.mxu0 %v1032
        %1043 = vmatprep.subr.mxu0 0.0
        %1044 = vmatpush1.msra.mxu0 %v1033
        %1045 = vmatprep.subr.mxu0 0.0
        %1046 = vmatpush1.msra.mxu0 %v1034
        %1047 = vmatprep.subr.mxu0 0.0
        %1048 = vmatpush1.msra.mxu0 %v1035
        %1049 = vmatprep.subr.mxu0 0.0
        %1050 = vmatpush1.msra.mxu0 %v1036
        %1051 = vmatprep.subr.mxu0 0.0
        %1052 = vmatpush1.msra.mxu0 %v1037
        %1053 = vmatprep.subr.mxu0 0.0
        %1054 = vmatpush1.msra.mxu0 %v1038
        %1055 = vmatprep.subr.mxu0 0.0
        %1056 = vmatpush1.msra.mxu0 0.0
        %1057 = vmatprep.subr.mxu0 0.0
        %1058 = vmatpush1.msra.mxu0 0.0
        %1059 = vmatprep.subr.mxu0 0.0
        %1060 = vmatpush1.msra.mxu0 0.0
        %1061 = vmatprep.subr.mxu0 0.0
        %1062 = vmatpush1.msra.mxu0 0.0
        %1063 = vmatprep.subr.mxu0 0.0
        %1064 = vmatpush1.msra.mxu0 0.0
        %1065 = vmatprep.subr.mxu0 0.0
        %1066 = vmatpush1.msra.mxu0 0.0
        %1067 = vmatprep.subr.mxu0 0.0
        %1068 = vmatpush1.msra.mxu0 0.0
        %1069 = vmatprep.subr.mxu0 0.0
        %1070 = vmatpush1.msra.mxu0 0.0
        %1071 = vmatprep.subr.mxu0 0.0
        %1072 = vmatpush1.msra.mxu0 0.0
        %1073 = vmatprep.subr.mxu0 0.0
        %1074 = vmatpush1.msra.mxu0 0.0
        %1075 = vmatprep.subr.mxu0 0.0
        %1076 = vmatpush1.msra.mxu0 0.0
        %1077 = vmatprep.subr.mxu0 0.0
        %1078 = vmatpush1.msra.mxu0 0.0
        %1079 = vmatprep.subr.mxu0 0.0
        %1080 = vmatpush1.msra.mxu0 0.0
        %1081 = vmatprep.subr.mxu0 0.0
        %1082 = vmatpush1.msra.mxu0 0.0
        %1083 = vmatprep.subr.mxu0 0.0
        %1084 = vmatpush1.msra.mxu0 0.0
        %1085 = vmatprep.subr.mxu0 0.0
        %1086 = vmatpush1.msra.mxu0 0.0
        %1087 = vmatprep.subr.mxu0 0.0
        %1088 = vmatpush1.msra.mxu0 0.0
        %1089 = vmatprep.subr.mxu0 0.0
        %1090 = vmatpush1.msra.mxu0 0.0
        %1091 = vmatprep.subr.mxu0 0.0
        %1092 = vmatpush1.msra.mxu0 0.0
        %1093 = vmatprep.subr.mxu0 0.0
        %1094 = vmatpush1.msra.mxu0 0.0
        %1095 = vmatprep.subr.mxu0 0.0
        %1096 = vmatpush1.msra.mxu0 0.0
        %1097 = vmatprep.subr.mxu0 0.0
        %1098 = vmatpush1.msra.mxu0 0.0
        %1099 = vmatprep.subr.mxu0 0.0
        %1100 = vmatpush1.msra.mxu0 0.0
        %1101 = vmatprep.subr.mxu0 0.0
        %1102 = vmatpush1.msra.mxu0 0.0
        %1103 = vmatprep.mubr.f32.mxu0 0.0
        %1104 = vmatmul.mubr.f32.gmra.mrb[0].mxu0 %v683
        %v1105 = vpop.f32.mrb[0].mxu0
        %v1106 = vadd.f32 %v679, %v1105
        %v1107 = vpop.f32.mrb[0].mxu0
        %1108 = vdwg.mxu0
        %1109 = vset.pattern.permute.xlu0 4
        %1110 = vperm.xlu0 %1109, %v425
        %v1111 = vpop.permute.xlu0 %1110
        %1113 = vset.pattern.permute.xlu0 4
        %1114 = vperm.xlu0 %1113, %v430
        %v1115 = vpop.permute.xlu0 %1114
        %1117 = vset.pattern.permute.xlu0 4
        %1118 = vperm.xlu0 %1117, %v435
        %v1119 = vpop.permute.xlu0 %1118
        %1121 = vset.pattern.permute.xlu0 4
        %1122 = vperm.xlu0 %1121, %v440
        %v1123 = vpop.permute.xlu0 %1122
        %1125 = vset.pattern.permute.xlu0 4
        %1126 = vperm.xlu0 %1125, %v445
        %v1127 = vpop.permute.xlu0 %1126
        %1129 = vset.pattern.permute.xlu0 4
        %1130 = vperm.xlu0 %1129, %v450
        %v1131 = vpop.permute.xlu0 %1130
        %1133 = vset.pattern.permute.xlu0 4
        %1134 = vperm.xlu0 %1133, %v455
        %v1135 = vpop.permute.xlu0 %1134
        %1137 = vset.pattern.permute.xlu0 4
        %1138 = vperm.xlu0 %1137, %v460
        %v1139 = vpop.permute.xlu0 %1138
        %v1141 = vadd.f32 %v1111, %v582
        %v1142 = vadd.f32 %v1115, %v587
        %v1143 = vadd.f32 %v1119, %v592
        %v1144 = vadd.f32 %v1123, %v597
        %v1145 = vadd.f32 %v1127, %v602
        %v1146 = vadd.f32 %v1131, %v607
        %v1147 = vadd.f32 %v1135, %v612
        %v1148 = vadd.f32 %v1139, %v617
        %v1149 = vmax.f32 %v1141, 0.0
        %v1150 = vmax.f32 %v1142, 0.0
        %v1151 = vmax.f32 %v1143, 0.0
        %v1152 = vmax.f32 %v1144, 0.0
        %v1153 = vmax.f32 %v1145, 0.0
        %v1154 = vmax.f32 %v1146, 0.0
        %v1155 = vmax.f32 %v1147, 0.0
        %v1156 = vmax.f32 %v1148, 0.0
        %1157 = vmatprep.subr.mxu0 0.0
        %1158 = vmatpush1.msra.mxu0 %v1149
        %1159 = vmatprep.subr.mxu0 0.0
        %1160 = vmatpush1.msra.mxu0 %v1150
        %1161 = vmatprep.subr.mxu0 0.0
        %1162 = vmatpush1.msra.mxu0 %v1151
        %1163 = vmatprep.subr.mxu0 0.0
        %1164 = vmatpush1.msra.mxu0 %v1152
        %1165 = vmatprep.subr.mxu0 0.0
        %1166 = vmatpush1.msra.mxu0 %v1153
        %1167 = vmatprep.subr.mxu0 0.0
        %1168 = vmatpush1.msra.mxu0 %v1154
        %1169 = vmatprep.subr.mxu0 0.0
        %1170 = vmatpush1.msra.mxu0 %v1155
        %1171 = vmatprep.subr.mxu0 0.0
        %1172 = vmatpush1.msra.mxu0 %v1156
        %1173 = vmatprep.subr.mxu0 0.0
        %1174 = vmatpush1.msra.mxu0 0.0
        %1175 = vmatprep.subr.mxu0 0.0
        %1176 = vmatpush1.msra.mxu0 0.0
        %1177 = vmatprep.subr.mxu0 0.0
        %1178 = vmatpush1.msra.mxu0 0.0
        %1179 = vmatprep.subr.mxu0 0.0
        %1180 = vmatpush1.msra.mxu0 0.0
        %1181 = vmatprep.subr.mxu0 0.0
        %1182 = vmatpush1.msra.mxu0 0.0
        %1183 = vmatprep.subr.mxu0 0.0
        %1184 = vmatpush1.msra.mxu0 0.0
        %1185 = vmatprep.subr.mxu0 0.0
        %1186 = vmatpush1.msra.mxu0 0.0
        %1187 = vmatprep.subr.mxu0 0.0
        %1188 = vmatpush1.msra.mxu0 0.0
        %1189 = vmatprep.subr.mxu0 0.0
        %1190 = vmatpush1.msra.mxu0 0.0
        %1191 = vmatprep.subr.mxu0 0.0
        %1192 = vmatpush1.msra.mxu0 0.0
        %1193 = vmatprep.subr.mxu0 0.0
        %1194 = vmatpush1.msra.mxu0 0.0
        %1195 = vmatprep.subr.mxu0 0.0
        %1196 = vmatpush1.msra.mxu0 0.0
        %1197 = vmatprep.subr.mxu0 0.0
        %1198 = vmatpush1.msra.mxu0 0.0
        %1199 = vmatprep.subr.mxu0 0.0
        %1200 = vmatpush1.msra.mxu0 0.0
        %1201 = vmatprep.subr.mxu0 0.0
        %1202 = vmatpush1.msra.mxu0 0.0
        %1203 = vmatprep.subr.mxu0 0.0
        %1204 = vmatpush1.msra.mxu0 0.0
        %1205 = vmatprep.subr.mxu0 0.0
        %1206 = vmatpush1.msra.mxu0 0.0
        %1207 = vmatprep.subr.mxu0 0.0
        %1208 = vmatpush1.msra.mxu0 0.0
        %1209 = vmatprep.subr.mxu0 0.0
        %1210 = vmatpush1.msra.mxu0 0.0
        %1211 = vmatprep.subr.mxu0 0.0
        %1212 = vmatpush1.msra.mxu0 0.0
        %1213 = vmatprep.subr.mxu0 0.0
        %1214 = vmatpush1.msra.mxu0 0.0
        %1215 = vmatprep.subr.mxu0 0.0
        %1216 = vmatpush1.msra.mxu0 0.0
        %1217 = vmatprep.subr.mxu0 0.0
        %1218 = vmatpush1.msra.mxu0 0.0
        %1219 = vmatprep.subr.mxu0 0.0
        %1220 = vmatpush1.msra.mxu0 0.0
        %1221 = vmatprep.mubr.f32.mxu0 0.0
        %1222 = vmatmul.mubr.f32.gmra.mrb[0].mxu0 %v683
        %v1223 = vpop.f32.mrb[0].mxu0
        %v1224 = vadd.f32 %v679, %v1223
        %v1225 = vpop.f32.mrb[0].mxu0
        %1226 = vdwg.mxu0
        %1227 = vset.pattern.permute.xlu0 5
        %1228 = vperm.xlu0 %1227, %v425
        %v1229 = vpop.permute.xlu0 %1228
        %1231 = vset.pattern.permute.xlu0 5
        %1232 = vperm.xlu0 %1231, %v430
        %v1233 = vpop.permute.xlu0 %1232
        %1235 = vset.pattern.permute.xlu0 5
        %1236 = vperm.xlu0 %1235, %v435
        %v1237 = vpop.permute.xlu0 %1236
        %1239 = vset.pattern.permute.xlu0 5
        %1240 = vperm.xlu0 %1239, %v440
        %v1241 = vpop.permute.xlu0 %1240
        %1243 = vset.pattern.permute.xlu0 5
        %1244 = vperm.xlu0 %1243, %v445
        %v1245 = vpop.permute.xlu0 %1244
        %1247 = vset.pattern.permute.xlu0 5
        %1248 = vperm.xlu0 %1247, %v450
        %v1249 = vpop.permute.xlu0 %1248
        %1251 = vset.pattern.permute.xlu0 5
        %1252 = vperm.xlu0 %1251, %v455
        %v1253 = vpop.permute.xlu0 %1252
        %1255 = vset.pattern.permute.xlu0 5
        %1256 = vperm.xlu0 %1255, %v460
        %v1257 = vpop.permute.xlu0 %1256
        %v1259 = vadd.f32 %v1229, %v582
        %v1260 = vadd.f32 %v1233, %v587
        %v1261 = vadd.f32 %v1237, %v592
        %v1262 = vadd.f32 %v1241, %v597
        %v1263 = vadd.f32 %v1245, %v602
        %v1264 = vadd.f32 %v1249, %v607
        %v1265 = vadd.f32 %v1253, %v612
        %v1266 = vadd.f32 %v1257, %v617
        %v1267 = vmax.f32 %v1259, 0.0
        %v1268 = vmax.f32 %v1260, 0.0
        %v1269 = vmax.f32 %v1261, 0.0
        %v1270 = vmax.f32 %v1262, 0.0
        %v1271 = vmax.f32 %v1263, 0.0
        %v1272 = vmax.f32 %v1264, 0.0
        %v1273 = vmax.f32 %v1265, 0.0
        %v1274 = vmax.f32 %v1266, 0.0
        %1275 = vmatprep.subr.mxu0 0.0
        %1276 = vmatpush1.msra.mxu0 %v1267
        %1277 = vmatprep.subr.mxu0 0.0
        %1278 = vmatpush1.msra.mxu0 %v1268
        %1279 = vmatprep.subr.mxu0 0.0
        %1280 = vmatpush1.msra.mxu0 %v1269
        %1281 = vmatprep.subr.mxu0 0.0
        %1282 = vmatpush1.msra.mxu0 %v1270
        %1283 = vmatprep.subr.mxu0 0.0
        %1284 = vmatpush1.msra.mxu0 %v1271
        %1285 = vmatprep.subr.mxu0 0.0
        %1286 = vmatpush1.msra.mxu0 %v1272
        %1287 = vmatprep.subr.mxu0 0.0
        %1288 = vmatpush1.msra.mxu0 %v1273
        %1289 = vmatprep.subr.mxu0 0.0
        %1290 = vmatpush1.msra.mxu0 %v1274
        %1291 = vmatprep.subr.mxu0 0.0
        %1292 = vmatpush1.msra.mxu0 0.0
        %1293 = vmatprep.subr.mxu0 0.0
        %1294 = vmatpush1.msra.mxu0 0.0
        %1295 = vmatprep.subr.mxu0 0.0
        %1296 = vmatpush1.msra.mxu0 0.0
        %1297 = vmatprep.subr.mxu0 0.0
        %1298 = vmatpush1.msra.mxu0 0.0
        %1299 = vmatprep.subr.mxu0 0.0
        %1300 = vmatpush1.msra.mxu0 0.0
        %1301 = vmatprep.subr.mxu0 0.0
        %1302 = vmatpush1.msra.mxu0 0.0
        %1303 = vmatprep.subr.mxu0 0.0
        %1304 = vmatpush1.msra.mxu0 0.0
        %1305 = vmatprep.subr.mxu0 0.0
        %1306 = vmatpush1.msra.mxu0 0.0
        %1307 = vmatprep.subr.mxu0 0.0
        %1308 = vmatpush1.msra.mxu0 0.0
        %1309 = vmatprep.subr.mxu0 0.0
        %1310 = vmatpush1.msra.mxu0 0.0
        %1311 = vmatprep.subr.mxu0 0.0
        %1312 = vmatpush1.msra.mxu0 0.0
        %1313 = vmatprep.subr.mxu0 0.0
        %1314 = vmatpush1.msra.mxu0 0.0
        %1315 = vmatprep.subr.mxu0 0.0
        %1316 = vmatpush1.msra.mxu0 0.0
        %1317 = vmatprep.subr.mxu0 0.0
        %1318 = vmatpush1.msra.mxu0 0.0
        %1319 = vmatprep.subr.mxu0 0.0
        %1320 = vmatpush1.msra.mxu0 0.0
        %1321 = vmatprep.subr.mxu0 0.0
        %1322 = vmatpush1.msra.mxu0 0.0
        %1323 = vmatprep.subr.mxu0 0.0
        %1324 = vmatpush1.msra.mxu0 0.0
        %1325 = vmatprep.subr.mxu0 0.0
        %1326 = vmatpush1.msra.mxu0 0.0
        %1327 = vmatprep.subr.mxu0 0.0
        %1328 = vmatpush1.msra.mxu0 0.0
        %1329 = vmatprep.subr.mxu0 0.0
        %1330 = vmatpush1.msra.mxu0 0.0
        %1331 = vmatprep.subr.mxu0 0.0
        %1332 = vmatpush1.msra.mxu0 0.0
        %1333 = vmatprep.subr.mxu0 0.0
        %1334 = vmatpush1.msra.mxu0 0.0
        %1335 = vmatprep.subr.mxu0 0.0
        %1336 = vmatpush1.msra.mxu0 0.0
        %1337 = vmatprep.subr.mxu0 0.0
        %1338 = vmatpush1.msra.mxu0 0.0
        %1339 = vmatprep.mubr.f32.mxu0 0.0
        %1340 = vmatmul.mubr.f32.gmra.mrb[0].mxu0 %v683
        %v1341 = vpop.f32.mrb[0].mxu0
        %v1342 = vadd.f32 %v679, %v1341
        %v1343 = vpop.f32.mrb[0].mxu0
        %1344 = vdwg.mxu0
        %1345 = vset.pattern.permute.xlu0 6
        %1346 = vperm.xlu0 %1345, %v425
        %v1347 = vpop.permute.xlu0 %1346
        %1349 = vset.pattern.permute.xlu0 6
        %1350 = vperm.xlu0 %1349, %v430
        %v1351 = vpop.permute.xlu0 %1350
        %1353 = vset.pattern.permute.xlu0 6
        %1354 = vperm.xlu0 %1353, %v435
        %v1355 = vpop.permute.xlu0 %1354
        %1357 = vset.pattern.permute.xlu0 6
        %1358 = vperm.xlu0 %1357, %v440
        %v1359 = vpop.permute.xlu0 %1358
        %1361 = vset.pattern.permute.xlu0 6
        %1362 = vperm.xlu0 %1361, %v445
        %v1363 = vpop.permute.xlu0 %1362
        %1365 = vset.pattern.permute.xlu0 6
        %1366 = vperm.xlu0 %1365, %v450
        %v1367 = vpop.permute.xlu0 %1366
        %1369 = vset.pattern.permute.xlu0 6
        %1370 = vperm.xlu0 %1369, %v455
        %v1371 = vpop.permute.xlu0 %1370
        %1373 = vset.pattern.permute.xlu0 6
        %1374 = vperm.xlu0 %1373, %v460
        %v1375 = vpop.permute.xlu0 %1374
        %v1377 = vadd.f32 %v1347, %v582
        %v1378 = vadd.f32 %v1351, %v587
        %v1379 = vadd.f32 %v1355, %v592
        %v1380 = vadd.f32 %v1359, %v597
        %v1381 = vadd.f32 %v1363, %v602
        %v1382 = vadd.f32 %v1367, %v607
        %v1383 = vadd.f32 %v1371, %v612
        %v1384 = vadd.f32 %v1375, %v617
        %v1385 = vmax.f32 %v1377, 0.0
        %v1386 = vmax.f32 %v1378, 0.0
        %v1387 = vmax.f32 %v1379, 0.0
        %v1388 = vmax.f32 %v1380, 0.0
        %v1389 = vmax.f32 %v1381, 0.0
        %v1390 = vmax.f32 %v1382, 0.0
        %v1391 = vmax.f32 %v1383, 0.0
        %v1392 = vmax.f32 %v1384, 0.0
        %1393 = vmatprep.subr.mxu0 0.0
        %1394 = vmatpush1.msra.mxu0 %v1385
        %1395 = vmatprep.subr.mxu0 0.0
        %1396 = vmatpush1.msra.mxu0 %v1386
        %1397 = vmatprep.subr.mxu0 0.0
        %1398 = vmatpush1.msra.mxu0 %v1387
        %1399 = vmatprep.subr.mxu0 0.0
        %1400 = vmatpush1.msra.mxu0 %v1388
        %1401 = vmatprep.subr.mxu0 0.0
        %1402 = vmatpush1.msra.mxu0 %v1389
        %1403 = vmatprep.subr.mxu0 0.0
        %1404 = vmatpush1.msra.mxu0 %v1390
        %1405 = vmatprep.subr.mxu0 0.0
        %1406 = vmatpush1.msra.mxu0 %v1391
        %1407 = vmatprep.subr.mxu0 0.0
        %1408 = vmatpush1.msra.mxu0 %v1392
        %1409 = vmatprep.subr.mxu0 0.0
        %1410 = vmatpush1.msra.mxu0 0.0
        %1411 = vmatprep.subr.mxu0 0.0
        %1412 = vmatpush1.msra.mxu0 0.0
        %1413 = vmatprep.subr.mxu0 0.0
        %1414 = vmatpush1.msra.mxu0 0.0
        %1415 = vmatprep.subr.mxu0 0.0
        %1416 = vmatpush1.msra.mxu0 0.0
        %1417 = vmatprep.subr.mxu0 0.0
        %1418 = vmatpush1.msra.mxu0 0.0
        %1419 = vmatprep.subr.mxu0 0.0
        %1420 = vmatpush1.msra.mxu0 0.0
        %1421 = vmatprep.subr.mxu0 0.0
        %1422 = vmatpush1.msra.mxu0 0.0
        %1423 = vmatprep.subr.mxu0 0.0
        %1424 = vmatpush1.msra.mxu0 0.0
        %1425 = vmatprep.subr.mxu0 0.0
        %1426 = vmatpush1.msra.mxu0 0.0
        %1427 = vmatprep.subr.mxu0 0.0
        %1428 = vmatpush1.msra.mxu0 0.0
        %1429 = vmatprep.subr.mxu0 0.0
        %1430 = vmatpush1.msra.mxu0 0.0
        %1431 = vmatprep.subr.mxu0 0.0
        %1432 = vmatpush1.msra.mxu0 0.0
        %1433 = vmatprep.subr.mxu0 0.0
        %1434 = vmatpush1.msra.mxu0 0.0
        %1435 = vmatprep.subr.mxu0 0.0
        %1436 = vmatpush1.msra.mxu0 0.0
        %1437 = vmatprep.subr.mxu0 0.0
        %1438 = vmatpush1.msra.mxu0 0.0
        %1439 = vmatprep.subr.mxu0 0.0
        %1440 = vmatpush1.msra.mxu0 0.0
        %1441 = vmatprep.subr.mxu0 0.0
        %1442 = vmatpush1.msra.mxu0 0.0
        %1443 = vmatprep.subr.mxu0 0.0
        %1444 = vmatpush1.msra.mxu0 0.0
        %1445 = vmatprep.subr.mxu0 0.0
        %1446 = vmatpush1.msra.mxu0 0.0
        %1447 = vmatprep.subr.mxu0 0.0
        %1448 = vmatpush1.msra.mxu0 0.0
        %1449 = vmatprep.subr.mxu0 0.0
        %1450 = vmatpush1.msra.mxu0 0.0
        %1451 = vmatprep.subr.mxu0 0.0
        %1452 = vmatpush1.msra.mxu0 0.0
        %1453 = vmatprep.subr.mxu0 0.0
        %1454 = vmatpush1.msra.mxu0 0.0
        %1455 = vmatprep.subr.mxu0 0.0
        %1456 = vmatpush1.msra.mxu0 0.0
        %1457 = vmatprep.mubr.f32.mxu0 0.0
        %1458 = vmatmul.mubr.f32.gmra.mrb[0].mxu0 %v683
        %v1459 = vpop.f32.mrb[0].mxu0
        %v1460 = vadd.f32 %v679, %v1459
        %v1461 = vpop.f32.mrb[0].mxu0
        %1462 = vdwg.mxu0
        %1463 = vset.pattern.permute.xlu0 7
        %1464 = vperm.xlu0 %1463, %v425
        %v1465 = vpop.permute.xlu0 %1464
        %1467 = vset.pattern.permute.xlu0 7
        %1468 = vperm.xlu0 %1467, %v430
        %v1469 = vpop.permute.xlu0 %1468
        %1471 = vset.pattern.permute.xlu0 7
        %1472 = vperm.xlu0 %1471, %v435
        %v1473 = vpop.permute.xlu0 %1472
        %1475 = vset.pattern.permute.xlu0 7
        %1476 = vperm.xlu0 %1475, %v440
        %v1477 = vpop.permute.xlu0 %1476
        %1479 = vset.pattern.permute.xlu0 7
        %1480 = vperm.xlu0 %1479, %v445
        %v1481 = vpop.permute.xlu0 %1480
        %1483 = vset.pattern.permute.xlu0 7
        %1484 = vperm.xlu0 %1483, %v450
        %v1485 = vpop.permute.xlu0 %1484
        %1487 = vset.pattern.permute.xlu0 7
        %1488 = vperm.xlu0 %1487, %v455
        %v1489 = vpop.permute.xlu0 %1488
        %1491 = vset.pattern.permute.xlu0 7
        %1492 = vperm.xlu0 %1491, %v460
        %v1493 = vpop.permute.xlu0 %1492
        %v1495 = vadd.f32 %v1465, %v582
        %v1496 = vadd.f32 %v1469, %v587
        %v1497 = vadd.f32 %v1473, %v592
        %v1498 = vadd.f32 %v1477, %v597
        %v1499 = vadd.f32 %v1481, %v602
        %v1500 = vadd.f32 %v1485, %v607
        %v1501 = vadd.f32 %v1489, %v612
        %v1502 = vadd.f32 %v1493, %v617
        %v1503 = vmax.f32 %v1495, 0.0
        %v1504 = vmax.f32 %v1496, 0.0
        %v1505 = vmax.f32 %v1497, 0.0
        %v1506 = vmax.f32 %v1498, 0.0
        %v1507 = vmax.f32 %v1499, 0.0
        %v1508 = vmax.f32 %v1500, 0.0
        %v1509 = vmax.f32 %v1501, 0.0
        %v1510 = vmax.f32 %v1502, 0.0
        %1511 = vmatprep.subr.mxu0 0.0
        %1512 = vmatpush1.msra.mxu0 %v1503
        %1513 = vmatprep.subr.mxu0 0.0
        %1514 = vmatpush1.msra.mxu0 %v1504
        %1515 = vmatprep.subr.mxu0 0.0
        %1516 = vmatpush1.msra.mxu0 %v1505
        %1517 = vmatprep.subr.mxu0 0.0
        %1518 = vmatpush1.msra.mxu0 %v1506
        %1519 = vmatprep.subr.mxu0 0.0
        %1520 = vmatpush1.msra.mxu0 %v1507
        %1521 = vmatprep.subr.mxu0 0.0
        %1522 = vmatpush1.msra.mxu0 %v1508
        %1523 = vmatprep.subr.mxu0 0.0
        %1524 = vmatpush1.msra.mxu0 %v1509
        %1525 = vmatprep.subr.mxu0 0.0
        %1526 = vmatpush1.msra.mxu0 %v1510
        %1527 = vmatprep.subr.mxu0 0.0
        %1528 = vmatpush1.msra.mxu0 0.0
        %1529 = vmatprep.subr.mxu0 0.0
        %1530 = vmatpush1.msra.mxu0 0.0
        %1531 = vmatprep.subr.mxu0 0.0
        %1532 = vmatpush1.msra.mxu0 0.0
        %1533 = vmatprep.subr.mxu0 0.0
        %1534 = vmatpush1.msra.mxu0 0.0
        %1535 = vmatprep.subr.mxu0 0.0
        %1536 = vmatpush1.msra.mxu0 0.0
        %1537 = vmatprep.subr.mxu0 0.0
        %1538 = vmatpush1.msra.mxu0 0.0
        %1539 = vmatprep.subr.mxu0 0.0
        %1540 = vmatpush1.msra.mxu0 0.0
        %1541 = vmatprep.subr.mxu0 0.0
        %1542 = vmatpush1.msra.mxu0 0.0
        %1543 = vmatprep.subr.mxu0 0.0
        %1544 = vmatpush1.msra.mxu0 0.0
        %1545 = vmatprep.subr.mxu0 0.0
        %1546 = vmatpush1.msra.mxu0 0.0
        %1547 = vmatprep.subr.mxu0 0.0
        %1548 = vmatpush1.msra.mxu0 0.0
        %1549 = vmatprep.subr.mxu0 0.0
        %1550 = vmatpush1.msra.mxu0 0.0
        %1551 = vmatprep.subr.mxu0 0.0
        %1552 = vmatpush1.msra.mxu0 0.0
        %1553 = vmatprep.subr.mxu0 0.0
        %1554 = vmatpush1.msra.mxu0 0.0
        %1555 = vmatprep.subr.mxu0 0.0
        %1556 = vmatpush1.msra.mxu0 0.0
        %1557 = vmatprep.subr.mxu0 0.0
        %1558 = vmatpush1.msra.mxu0 0.0
        %1559 = vmatprep.subr.mxu0 0.0
        %1560 = vmatpush1.msra.mxu0 0.0
        %1561 = vmatprep.subr.mxu0 0.0
        %1562 = vmatpush1.msra.mxu0 0.0
        %1563 = vmatprep.subr.mxu0 0.0
        %1564 = vmatpush1.msra.mxu0 0.0
        %1565 = vmatprep.subr.mxu0 0.0
        %1566 = vmatpush1.msra.mxu0 0.0
        %1567 = vmatprep.subr.mxu0 0.0
        %1568 = vmatpush1.msra.mxu0 0.0
        %1569 = vmatprep.subr.mxu0 0.0
        %1570 = vmatpush1.msra.mxu0 0.0
        %1571 = vmatprep.subr.mxu0 0.0
        %1572 = vmatpush1.msra.mxu0 0.0
        %1573 = vmatprep.subr.mxu0 0.0
        %1574 = vmatpush1.msra.mxu0 0.0
        %1575 = vmatprep.mubr.f32.mxu0 0.0
        %1576 = vmatmul.mubr.f32.gmra.mrb[0].mxu0 %v683
        %v1577 = vpop.f32.mrb[0].mxu0
        %v1578 = vadd.f32 %v679, %v1577
        %v1579 = vpop.f32.mrb[0].mxu0
        %1580 = vdwg.mxu0
        %v1582 = vrot.slane %v870, 7
        %v1585 = vrot.slane %v988, 6
        %v1588 = vrot.slane %v1106, 5
        %v1591 = vrot.slane %v1224, 4
        %v1594 = vrot.slane %v1342, 3
        %v1597 = vrot.slane %v1460, 2
        %v1600 = vrot.slane %v1578, 1
        %vm1602 = vcmask 1040384
        %v1603 = vsel %vm1602, %v752, %v1582
        %vm1604 = vcmask 1041408
        %v1605 = vsel %vm1604, %v1603, %v1585
        %vm1606 = vcmask 1042432
        %v1607 = vsel %vm1606, %v1605, %v1588
        %vm1608 = vcmask 1043456
        %v1609 = vsel %vm1608, %v1607, %v1591
        %vm1610 = vcmask 1044480
        %v1611 = vsel %vm1610, %v1609, %v1594
        %vm1612 = vcmask 1045504
        %v1613 = vsel %vm1612, %v1611, %v1597
        %vm1614 = vcmask 1046528
        %v1615 = vsel %vm1614, %v1613, %v1600
        %v1617 = vrot.slane %v752, 1
        %v1619 = vrot.slane %v988, 7
        %v1621 = vrot.slane %v1106, 6
        %v1623 = vrot.slane %v1224, 5
        %v1625 = vrot.slane %v1342, 4
        %v1627 = vrot.slane %v1460, 3
        %v1629 = vrot.slane %v1578, 2
        %v1631 = vsel %vm1602, %v1617, %v870
        %v1632 = vsel %vm1604, %v1631, %v1619
        %v1633 = vsel %vm1606, %v1632, %v1621
        %v1634 = vsel %vm1608, %v1633, %v1623
        %v1635 = vsel %vm1610, %v1634, %v1625
        %v1636 = vsel %vm1612, %v1635, %v1627
        %v1637 = vsel %vm1614, %v1636, %v1629
        %v1638 = vrot.slane %v752, 2
        %v1640 = vrot.slane %v870, 1
        %v1642 = vrot.slane %v1106, 7
        %v1644 = vrot.slane %v1224, 6
        %v1646 = vrot.slane %v1342, 5
        %v1648 = vrot.slane %v1460, 4
        %v1650 = vrot.slane %v1578, 3
        %v1652 = vsel %vm1602, %v1638, %v1640
        %v1653 = vsel %vm1604, %v1652, %v988
        %v1654 = vsel %vm1606, %v1653, %v1642
        %v1655 = vsel %vm1608, %v1654, %v1644
        %v1656 = vsel %vm1610, %v1655, %v1646
        %v1657 = vsel %vm1612, %v1656, %v1648
        %v1658 = vsel %vm1614, %v1657, %v1650
        %v1659 = vsel %vm681, %v1658, -inf
        %v1660 = vrot.slane %v1659, 4
        %v1661 = vmax.f32 %v1659, %v1660
        %v1662 = vrot.slane %v1661, 2
        %v1663 = vmax.f32 %v1661, %v1662
        %v1664 = vrot.slane %v1663, 1
        %v1665 = vmax.f32 %v1663, %v1664
        %v1666 = vsub.f32 %v1658, %v1665
        %v1667 = vmul.f32 %v1666, 1.442695
        %v1668 = vpow.pop %v1667
        %v1669 = vsel %vm681, %v1668, 0.0
        %v1670 = vrot.slane %v1669, 4
        %v1671 = vadd.f32 %v1669, %v1670
        %v1672 = vrot.slane %v1671, 2
        %v1673 = vadd.f32 %v1671, %v1672
        %v1674 = vrot.slane %v1673, 1
        %v1675 = vadd.f32 %v1673, %v1674
        %v1676 = vrcp.pop %v1675
        %v1677 = vmul.f32 %v1668, %v1676
        %1678 = vst.msk [vmem:[%s314] sm:$0xff] %vm681, %v1677
        %1680 = vrot.lane.b32.xlu0 %v1637, 64
        %v1681 = vpop.permute.xlu0 %1680
        %v1683 = vsel %vm681, %v1615, %v1681
        %1684 = vst [vmem:[%s307] sm:$0xff] %v1683
        %v1685 = vmul.f32 %v1615, %v1677
        %v1686 = vsel %vm681, %v1685, 0.0
        %v1687 = vrot.slane %v1686, 4
        %v1688 = vadd.f32 %v1686, %v1687
        %v1689 = vrot.slane %v1688, 2
        %v1690 = vadd.f32 %v1688, %v1689
        %v1691 = vrot.slane %v1690, 1
        %v1692 = vadd.f32 %v1690, %v1691
        %v1693 = vmul.f32 %v1637, %v1677
        %v1694 = vsel %vm681, %v1693, 0.0
        %v1695 = vrot.slane %v1694, 4
        %v1696 = vadd.f32 %v1694, %v1695
        %v1697 = vrot.slane %v1696, 2
        %v1698 = vadd.f32 %v1696, %v1697
        %v1699 = vrot.slane %v1698, 1
        %v1700 = vadd.f32 %v1698, %v1699
        %v1701 = vsel %vm1602, %v1692, %v1700
        %vm1702 = vcmask 517120
        %1703 = vst.msk [vmem:[%s300] sm:$0x3] %vm1702, %v1701
        %s1704 = sand.u32 %s165, 1
        %s1705 = scalar_lea.sflag [#allocation3], %s1704
        %s1706 = sand.u32 %s165, 1
        %s1707 = smul.addr %s1706, 2
        %s1708 = scalar_lea.vmem [#allocation2], %s1707
        %s1709 = sand.u32 %s26, 1
        %s1710 = scalar_lea.sflag [#allocation5], %s1709
        %s1711 = sand.u32 %s191, 1
        %s1712 = smul.addr %s1711, 8
        %s1713 = scalar_lea.vmem [#allocation4], %s1712
        %s1714 = sand.u32 %s26, 1
        %s1715 = scalar_lea.sflag [#allocation5], %s1714
        %s1716 = sand.u32 %s217, 1
        %s1717 = smul.addr %s1716, 8
        %s1718 = scalar_lea.vmem [#allocation6], %s1717
        // Predicated region
        $region45: #{tpu_custom_call.1} parent=43 // pred_check
          %p1719 = pneg %p175
        $region46: #{tpu_custom_call.1} parent=43 // pred_check_branch
          %1721 = sbr.rel (%p1719) target = $region48
        $region47: #{tpu_custom_call.1} parent=43 // pred_region
          %s1723 = ssub.s32 32, 32
          %1724 = vsyncadd %s1705, %s1723
          %s1725 = smul.addr %s26, 32
          %s1726 = scalar_lea.hbm %s6, %s1725
          %s1728 = sshll.u32 %s1708, 4
          %s1729 = int_to_ptr.vmem [resolvable:$true] %s1728
          %1731 = dma.vmem_to_hbm [thread:$0]  %s1729, 32, %s1726, %s1705
        $region48: #{tpu_custom_call.1} parent=43 // pred_fallthru
          _
        // Predicated region
        $region49: #{tpu_custom_call.1} parent=43 // pred_check
          %p1732 = pneg %p201
        $region50: #{tpu_custom_call.1} parent=43 // pred_check_branch
          %1734 = sbr.rel (%p1732) target = $region52
        $region51: #{tpu_custom_call.1} parent=43 // pred_region
          %s1736 = ssub.s32 128, 128
          %1737 = vsyncadd %s1710, %s1736
          %s1738 = smul.addr %s26, 128
          %s1739 = scalar_lea.hbm %s7, %s1738
          %s1741 = sshll.u32 %s1713, 4
          %s1742 = int_to_ptr.vmem [resolvable:$true] %s1741
          %1744 = dma.vmem_to_hbm [thread:$0]  %s1742, 128, %s1739, %s1710
        $region52: #{tpu_custom_call.1} parent=43 // pred_fallthru
          _
        // Predicated region
        $region53: #{tpu_custom_call.1} parent=43 // pred_check
          %p1745 = pneg %p227
        $region54: #{tpu_custom_call.1} parent=43 // pred_check_branch
          %1747 = sbr.rel (%p1745) target = $region56
        $region55: #{tpu_custom_call.1} parent=43 // pred_region
          %s1749 = ssub.s32 128, 128
          %1750 = vsyncadd %s1715, %s1749
          %s1751 = smul.addr %s26, 128
          %s1752 = scalar_lea.hbm %s8, %s1751
          %s1754 = sshll.u32 %s1718, 4
          %s1755 = int_to_ptr.vmem [resolvable:$true] %s1754
          %1757 = dma.vmem_to_hbm [thread:$0]  %s1755, 128, %s1752, %s1715
        $region56: #{tpu_custom_call.1} parent=43 // pred_fallthru
          _
      $region44: #{tpu_custom_call.1} parent=5 // pred_fallthru
        _
      %p1758 = scmp.le.s32.totalorder 2, %s21
      // Predicated region
      $region57: #{tpu_custom_call.1} parent=5 // pred_check
        %p1759 = pneg %p1758
      $region58: #{tpu_custom_call.1} parent=5 // pred_check_branch
        %1761 = sbr.rel (%p1759) target = $region60
      $region59: #{tpu_custom_call.1} parent=5 // pred_region
        %s1762 = ssub.s32 %s21, 2
        // Predicated region
        $region61: #{tpu_custom_call.1} parent=59 // pred_check
          %p1763 = pneg %p181
        $region62: #{tpu_custom_call.1} parent=59 // pred_check_branch
          %1765 = sbr.rel (%p1763) target = $region64
        $region63: #{tpu_custom_call.1} parent=59 // pred_region
          %s1766 = sand.u32 %s166, 1
          %s1767 = scalar_lea.sflag [#allocation3], %s1766
          %s1768 = sand.u32 %s166, 1
          %s1769 = smul.addr %s1768, 2
          %s1770 = scalar_lea.vmem [#allocation2], %s1769
          %1771 = dma.done %s1767, 32
        $region64: #{tpu_custom_call.1} parent=59 // pred_fallthru
          _
        // Predicated region
        $region65: #{tpu_custom_call.1} parent=59 // pred_check
          %p1772 = pneg %p207
        $region66: #{tpu_custom_call.1} parent=59 // pred_check_branch
          %1774 = sbr.rel (%p1772) target = $region68
        $region67: #{tpu_custom_call.1} parent=59 // pred_region
          %s1775 = sand.u32 %s27, 1
          %s1776 = scalar_lea.sflag [#allocation5], %s1775
          %s1777 = sand.u32 %s192, 1
          %s1778 = smul.addr %s1777, 8
          %s1779 = scalar_lea.vmem [#allocation4], %s1778
          %1780 = dma.done %s1776, 128
        $region68: #{tpu_custom_call.1} parent=59 // pred_fallthru
          _
        // Predicated region
        $region69: #{tpu_custom_call.1} parent=59 // pred_check
          %p1781 = pneg %p233
        $region70: #{tpu_custom_call.1} parent=59 // pred_check_branch
          %1783 = sbr.rel (%p1781) target = $region72
        $region71: #{tpu_custom_call.1} parent=59 // pred_region
          %s1784 = sand.u32 %s27, 1
          %s1785 = scalar_lea.sflag [#allocation5], %s1784
          %s1786 = sand.u32 %s218, 1
          %s1787 = smul.addr %s1786, 8
          %s1788 = scalar_lea.vmem [#allocation6], %s1787
          %1789 = dma.done %s1785, 128
        $region72: #{tpu_custom_call.1} parent=59 // pred_fallthru
          _
      $region60: #{tpu_custom_call.1} parent=5 // pred_fallthru
        _
    $region6: #{tpu_custom_call.1} parent=1 // loop_footer
      %s25 = sadd.s32 1, %s21
    $region7: #{tpu_custom_call.1} parent=1 // loop_footer_branch
      %20 = sbr.rel target = $region3
    $region8: #{tpu_custom_call.1} parent=1 // loop_exit
      _
    %1790 = vsyncpa [#allocation3], 1
    %s1791 = scalar_lea.sflag [#allocation3], 1
    %1792 = vsyncpa %s1791, 1
    %1793 = vsyncpa [#allocation5], 1
    %s1794 = scalar_lea.sflag [#allocation5], 1
    %1795 = vsyncpa %s1794, 1

</llo_original>
